<compile_context>
chip_gen: v5e
topology: v5e:2x2
jax: 0.10.0
libtpu: 0.0.40
codegen_flags: <defaults>
</compile_context>

<pallas_src>
import functools

import jax
import jax.numpy as jnp
from jax.experimental import pallas as pl
from jax.experimental.pallas import tpu as pltpu

# ----------------------------- model sizes -----------------------------
HIDDEN = 128          # lstm_size
EMBED = 128           # embedding_dim
NUM_LAYERS = 1
N_VOCAB = 256         # synthetic vocab size (lane-friendly)


# ----------------------- fused LSTM + FC kernel ------------------------
def _fused_lstm_fc_kernel(x_ref, h0_ref, c0_ref, wih_ref, whh_ref, b_ref,
                          wfc_ref, bfc_ref,
                          logits_ref, hout_ref, cout_ref,
                          gx_scr, hseq_scr, h_scr, c_scr,
                          *, tk, batch, hidden):
    """One grid step == one chunk of TK timesteps.

    x_ref      : (TK*B, E)  bf16   embedded inputs for this chunk (row = t*B + b)
    h0_ref     : (B, H)     f32    initial hidden state
    c0_ref     : (B, H)     f32    initial cell state
    wih_ref    : (E, 4H)    bf16   input->gates weights  (gate order i, f, g, o)
    whh_ref    : (H, 4H)    bf16   hidden->gates weights
    b_ref      : (1, 4H)    f32    combined bias (b_ih + b_hh)
    wfc_ref    : (H, V)     bf16   vocab projection weights (resident in VMEM)
    bfc_ref    : (1, V)     f32    vocab projection bias
    logits_ref : (TK*B, V)  f32    fused output logits for this chunk
    hout_ref   : (B, H)     f32    final hidden state
    cout_ref   : (B, H)     f32    final cell state
    gx_scr     : (TK*B, 4H) f32    hoisted input-projection gates
    hseq_scr   : (TK*B, H)  f32    per-timestep hidden outputs (stays in VMEM)
    h_scr/c_scr: (B, H)     f32    recurrent carry across grid steps
    """
    B, H = batch, hidden
    chunk = pl.program_id(0)

    # Seed the recurrent carry from the user-supplied initial state.
    @pl.when(chunk == 0)
    def _():
        h_scr[...] = h0_ref[...]
        c_scr[...] = c0_ref[...]

    # --- prologue: hoisted input projection (off the serial path) ----------
    # One big MXU matmul for the whole chunk; bias folded in here so there is
    # no per-step (1,4H)->(B,4H) broadcast-add inside the recurrence.
    gx_scr[...] = (
        jnp.dot(x_ref[...], wih_ref[...], preferred_element_type=jnp.float32)
        + b_ref[...])

    # --- recurrence: only h_prev @ W_hh + gate elementwise per step ---------
    # Static Python loop == fully unrolled (same as lax.fori_loop(unroll=True)
    # for a static trip count) so every slice offset below is static.
    h_prev = h_scr[...]
    c_prev = c_scr[...]
    whh = whh_ref[...]
    for t in range(tk):
        row = t * B
        gates = gx_scr[row:row + B, :] + jnp.dot(
            h_prev.astype(whh.dtype), whh, preferred_element_type=jnp.float32)
        i_g = jax.nn.sigmoid(gates[:, 0 * H:1 * H])
        f_g = jax.nn.sigmoid(gates[:, 1 * H:2 * H])
        g_g = jnp.tanh(gates[:, 2 * H:3 * H])
        o_g = jax.nn.sigmoid(gates[:, 3 * H:4 * H])
        c_prev = f_g * c_prev + i_g * g_g
        h_prev = o_g * jnp.tanh(c_prev)
        hseq_scr[row:row + B, :] = h_prev

    # Persist the carry for the next chunk and expose the final state.
    h_scr[...] = h_prev
    c_scr[...] = c_prev
    hout_ref[...] = h_prev
    cout_ref[...] = c_prev

    # --- epilogue: fused vocab projection (lane-dense, V % 128 == 0) --------
    logits_ref[...] = (
        jnp.dot(hseq_scr[...].astype(wfc_ref.dtype), wfc_ref[...],
                preferred_element_type=jnp.float32)
        + bfc_ref[...]).astype(logits_ref.dtype)


def run_fused_lstm(embed_flat, h0, c0, w_ih_t, w_hh_t, b_lstm, w_fc_t, b_fc,
                   *, seq_len, batch, time_chunk=None):
    """embed_flat: (T*B, E) bf16; h0/c0: (B, H) f32; weights bf16; biases f32."""
    T, B, H = seq_len, batch, HIDDEN
    E = embed_flat.shape[-1]
    V = w_fc_t.shape[-1]

    if time_chunk is None:
        time_chunk = T if T <= 32 else 8
    assert T % time_chunk == 0, "sequence length must be divisible by time_chunk"
    tk = time_chunk
    num_chunks = T // tk

    kernel = functools.partial(_fused_lstm_fc_kernel, tk=tk, batch=B, hidden=H)

    return pl.pallas_call(
        kernel,
        out_shape=(
            jax.ShapeDtypeStruct((T * B, V), jnp.float32),   # logits (flat)
            jax.ShapeDtypeStruct((B, H), jnp.float32),       # final h
            jax.ShapeDtypeStruct((B, H), jnp.float32),       # final c
        ),
        grid_spec=pltpu.PrefetchScalarGridSpec(
            num_scalar_prefetch=0,
            grid=(num_chunks,),
            in_specs=[
                pl.BlockSpec((tk * B, E), lambda c: (c, 0)),   # x chunk
                pl.BlockSpec((B, H), lambda c: (0, 0)),        # h0
                pl.BlockSpec((B, H), lambda c: (0, 0)),        # c0
                pl.BlockSpec((E, 4 * H), lambda c: (0, 0)),    # W_ih^T (resident)
                pl.BlockSpec((H, 4 * H), lambda c: (0, 0)),    # W_hh^T (resident)
                pl.BlockSpec((1, 4 * H), lambda c: (0, 0)),    # bias
                pl.BlockSpec((H, V), lambda c: (0, 0)),        # W_fc^T (resident)
                pl.BlockSpec((1, V), lambda c: (0, 0)),        # b_fc
            ],
            out_specs=[
                pl.BlockSpec((tk * B, V), lambda c: (c, 0)),   # logits chunk
                pl.BlockSpec((B, H), lambda c: (0, 0)),
                pl.BlockSpec((B, H), lambda c: (0, 0)),
            ],
            scratch_shapes=[
                pltpu.VMEM((tk * B, 4 * H), jnp.float32),      # gates_x
                pltpu.VMEM((tk * B, H), jnp.float32),          # h sequence
                pltpu.VMEM((B, H), jnp.float32),               # h carry
                pltpu.VMEM((B, H), jnp.float32),               # c carry
            ],
        ),
        compiler_params=pltpu.CompilerParams(
            # The time-chunk axis carries the recurrence -> must stay sequential.
            dimension_semantics=("arbitrary",),
        ),
    )(embed_flat, h0, c0, w_ih_t, w_hh_t, b_lstm, w_fc_t, b_fc)


# ----------------------------- parameters & forward -----------------------------
def init_params(key, n_vocab=N_VOCAB, hidden=HIDDEN, embed=EMBED):
    ks = jax.random.split(key, 7)
    k = 1.0 / jnp.sqrt(hidden)
    return {
        "emb": jax.random.normal(ks[0], (n_vocab, embed), jnp.float32),
        # Matmul weights stored pre-transposed and in bf16 (MXU-native);
        # accumulation is f32 (preferred_element_type) inside the kernel.
        "w_ih_t": jax.random.uniform(ks[1], (embed, 4 * hidden), jnp.float32,
                                     -k, k).astype(jnp.bfloat16),
        "w_hh_t": jax.random.uniform(ks[2], (hidden, 4 * hidden), jnp.float32,
                                     -k, k).astype(jnp.bfloat16),
        "b_lstm": (jax.random.uniform(ks[3], (1, 4 * hidden), jnp.float32, -k, k)
                   + jax.random.uniform(ks[4], (1, 4 * hidden), jnp.float32, -k, k)),
        "w_fc_t": jax.random.uniform(ks[5], (hidden, n_vocab), jnp.float32,
                                     -k, k).astype(jnp.bfloat16),
        "b_fc": jax.random.uniform(ks[6], (1, n_vocab), jnp.float32, -k, k),
    }


def my_lstm_forward(params, x_idx, prev_state):
    """x_idx: (T, B) int32; prev_state: (h0, c0) each (num_layers=1, B, H).

    Returns (logits (T, B, V), (h_n, c_n) each (1, B, H)).
    """
    h0, c0 = prev_state
    T, B = x_idx.shape

    # Embedding lookup (gather) -- plain-JAX glue; output feeds the hoisted
    # input-projection matmul inside the fused kernel.
    embed = jnp.take(params["emb"], x_idx, axis=0)              # (T, B, E) f32
    embed_flat = embed.reshape(T * B, EMBED).astype(jnp.bfloat16)

    logits_flat, h_n, c_n = run_fused_lstm(
        embed_flat, h0[0], c0[0],
        params["w_ih_t"], params["w_hh_t"], params["b_lstm"],
        params["w_fc_t"], params["b_fc"],
        seq_len=T, batch=B)

    logits = logits_flat.reshape(T, B, N_VOCAB)
    # Note: dropout=0.2 in nn.LSTM is a no-op with num_layers=1 (PyTorch warns).
    return logits, (h_n[None], c_n[None])


if __name__ == "__main__":
    key = jax.random.PRNGKey(0)
    pkey, xkey = jax.random.split(key)

    params = init_params(pkey)

    T, B = 8, 8
    x_idx = jax.random.randint(xkey, (T, B), 0, N_VOCAB, dtype=jnp.int32)
    h0 = jnp.zeros((NUM_LAYERS, B, HIDDEN), jnp.float32)
    c0 = jnp.zeros((NUM_LAYERS, B, HIDDEN), jnp.float32)

    logits, (h_n, c_n) = jax.jit(my_lstm_forward)(params, x_idx, (h0, c0))
    jax.block_until_ready((logits, h_n, c_n))

    assert logits.shape == (T, B, N_VOCAB)
    assert h_n.shape == (NUM_LAYERS, B, HIDDEN)
    assert c_n.shape == (NUM_LAYERS, B, HIDDEN)
    assert bool(jnp.all(jnp.isfinite(logits)))
    print("KERNEL_OK")
</pallas_src>

<mosaic_0001>
module attributes {stable_mosaic.version = 11 : i64} {
  func.func @_fused_lstm_fc_kernel(%arg0: i32, %arg1: memref<64x128xbf16, #tpu.memory_space<vmem>>, %arg2: memref<8x128xf32, #tpu.memory_space<vmem>>, %arg3: memref<8x128xf32, #tpu.memory_space<vmem>>, %arg4: memref<128x512xbf16, #tpu.memory_space<vmem>>, %arg5: memref<128x512xbf16, #tpu.memory_space<vmem>>, %arg6: memref<1x512xf32, #tpu.memory_space<vmem>>, %arg7: memref<128x256xbf16, #tpu.memory_space<vmem>>, %arg8: memref<1x256xf32, #tpu.memory_space<vmem>>, %arg9: memref<64x256xf32, #tpu.memory_space<vmem>>, %arg10: memref<8x128xf32, #tpu.memory_space<vmem>>, %arg11: memref<8x128xf32, #tpu.memory_space<vmem>>, %arg12: memref<64x512xf32, #tpu.memory_space<vmem>>, %arg13: memref<64x128xf32, #tpu.memory_space<vmem>>, %arg14: memref<8x128xf32, #tpu.memory_space<vmem>>, %arg15: memref<8x128xf32, #tpu.memory_space<vmem>>) attributes {dimension_semantics = [#tpu.dimension_semantics<arbitrary>], iteration_bounds = array<i64: 1>, scalar_prefetch = 0 : i64, scratch_operands = 4 : i64, tpu.core_type = #tpu.core_type<tc>, window_params = [{transform_indices = @transform_0, window_bounds = array<i64: 64, 128>}, {pipeline_mode = #tpu.pipeline_mode<synchronous>, transform_indices = @transform_1, window_bounds = array<i64: 8, 128>}, {pipeline_mode = #tpu.pipeline_mode<synchronous>, transform_indices = @transform_2, window_bounds = array<i64: 8, 128>}, {pipeline_mode = #tpu.pipeline_mode<synchronous>, transform_indices = @transform_3, window_bounds = array<i64: 128, 512>}, {pipeline_mode = #tpu.pipeline_mode<synchronous>, transform_indices = @transform_4, window_bounds = array<i64: 128, 512>}, {pipeline_mode = #tpu.pipeline_mode<synchronous>, transform_indices = @transform_5, window_bounds = array<i64: 1, 512>}, {pipeline_mode = #tpu.pipeline_mode<synchronous>, transform_indices = @transform_6, window_bounds = array<i64: 128, 256>}, {pipeline_mode = #tpu.pipeline_mode<synchronous>, transform_indices = @transform_7, window_bounds = array<i64: 1, 256>}, {transform_indices = @transform_8, window_bounds = array<i64: 64, 256>}, {pipeline_mode = #tpu.pipeline_mode<synchronous>, transform_indices = @transform_9, window_bounds = array<i64: 8, 128>}, {pipeline_mode = #tpu.pipeline_mode<synchronous>, transform_indices = @transform_10, window_bounds = array<i64: 8, 128>}]} {
    %c0_i32 = arith.constant 0 : i32
    %0 = arith.cmpi eq, %arg0, %c0_i32 : i32
    %1 = arith.extui %0 : i1 to i32
    %c0_i32_0 = arith.constant 0 : i32
    %2 = arith.cmpi ne, %1, %c0_i32_0 : i32
    scf.if %2 {
      %c0_88 = arith.constant 0 : index
      %c0_89 = arith.constant 0 : index
      %265 = vector.load %arg2[%c0_88, %c0_89] : memref<8x128xf32, #tpu.memory_space<vmem>>, vector<8x128xf32>
      %c0_90 = arith.constant 0 : index
      %c0_91 = arith.constant 0 : index
      %266 = vector.load %arg14[%c0_90, %c0_91] : memref<8x128xf32, #tpu.memory_space<vmem>>, vector<8x128xf32>
      tpu.vector_store %arg14[%c0_90, %c0_91], %265 {strides = array<i32>} : memref<8x128xf32, #tpu.memory_space<vmem>>, vector<8x128xf32>,
      %c0_92 = arith.constant 0 : index
      %c0_93 = arith.constant 0 : index
      %267 = vector.load %arg3[%c0_92, %c0_93] : memref<8x128xf32, #tpu.memory_space<vmem>>, vector<8x128xf32>
      %c0_94 = arith.constant 0 : index
      %c0_95 = arith.constant 0 : index
      %268 = vector.load %arg15[%c0_94, %c0_95] : memref<8x128xf32, #tpu.memory_space<vmem>>, vector<8x128xf32>
      tpu.vector_store %arg15[%c0_94, %c0_95], %267 {strides = array<i32>} : memref<8x128xf32, #tpu.memory_space<vmem>>, vector<8x128xf32>,
    } else {
    }
    %c0 = arith.constant 0 : index
    %c0_1 = arith.constant 0 : index
    %3 = vector.load %arg1[%c0, %c0_1] : memref<64x128xbf16, #tpu.memory_space<vmem>>, vector<64x128xbf16>
    %c0_2 = arith.constant 0 : index
    %c0_3 = arith.constant 0 : index
    %4 = vector.load %arg4[%c0_2, %c0_3] : memref<128x512xbf16, #tpu.memory_space<vmem>>, vector<128x512xbf16>
    %cst = arith.constant dense<0.000000e+00> : vector<64x512xf32>
    %5 = tpu.matmul %3, %4, %cst {dimension_numbers = #tpu.dot_dimension_numbers<[1], [0], [0], [1], [0, 0, 1, 1], [], []>} : vector<64x128xbf16>, vector<128x512xbf16>, vector<64x512xf32> -> vector<64x512xf32>
    %c0_4 = arith.constant 0 : index
    %c0_5 = arith.constant 0 : index
    %6 = vector.load %arg6[%c0_4, %c0_5] : memref<1x512xf32, #tpu.memory_space<vmem>>, vector<1x512xf32>
    %7 = vector.broadcast %6 : vector<1x512xf32> to vector<64x512xf32>
    %8 = arith.addf %5, %7 : vector<64x512xf32>
    %c0_6 = arith.constant 0 : index
    %c0_7 = arith.constant 0 : index
    %9 = vector.load %arg12[%c0_6, %c0_7] : memref<64x512xf32, #tpu.memory_space<vmem>>, vector<64x512xf32>
    tpu.vector_store %arg12[%c0_6, %c0_7], %8 {strides = array<i32>} : memref<64x512xf32, #tpu.memory_space<vmem>>, vector<64x512xf32>,
    %c0_8 = arith.constant 0 : index
    %c0_9 = arith.constant 0 : index
    %10 = vector.load %arg14[%c0_8, %c0_9] : memref<8x128xf32, #tpu.memory_space<vmem>>, vector<8x128xf32>
    %c0_10 = arith.constant 0 : index
    %c0_11 = arith.constant 0 : index
    %11 = vector.load %arg15[%c0_10, %c0_11] : memref<8x128xf32, #tpu.memory_space<vmem>>, vector<8x128xf32>
    %c0_12 = arith.constant 0 : index
    %c0_13 = arith.constant 0 : index
    %12 = vector.load %arg5[%c0_12, %c0_13] : memref<128x512xbf16, #tpu.memory_space<vmem>>, vector<128x512xbf16>
    %c0_14 = arith.constant 0 : index
    %c0_15 = arith.constant 0 : index
    %13 = vector.load %arg12[%c0_14, %c0_15] : memref<64x512xf32, #tpu.memory_space<vmem>>, vector<8x512xf32>
    %14 = arith.truncf %10 : vector<8x128xf32> to vector<8x128xbf16>
    %cst_16 = arith.constant dense<0.000000e+00> : vector<8x512xf32>
    %15 = tpu.matmul %14, %12, %cst_16 {dimension_numbers = #tpu.dot_dimension_numbers<[1], [0], [0], [1], [0, 0, 1, 1], [], []>} : vector<8x128xbf16>, vector<128x512xbf16>, vector<8x512xf32> -> vector<8x512xf32>
    %16 = arith.addf %13, %15 : vector<8x512xf32>
    %17 = vector.extract_strided_slice %16 {offsets = [0, 0], sizes = [8, 128], strides = [1, 1]} : vector<8x512xf32> to vector<8x128xf32>
    %18 = arith.negf %17 : vector<8x128xf32>
    %19 = math.exp %18 : vector<8x128xf32>
    %cst_17 = arith.constant 1.000000e+00 : f32
    %20 = vector.broadcast %cst_17 : f32 to vector<8x128xf32>
    %21 = arith.addf %20, %19 : vector<8x128xf32>
    %22 = arith.divf %20, %21 : vector<8x128xf32>
    %23 = vector.extract_strided_slice %16 {offsets = [0, 128], sizes = [8, 128], strides = [1, 1]} : vector<8x512xf32> to vector<8x128xf32>
    %24 = arith.negf %23 : vector<8x128xf32>
    %25 = math.exp %24 : vector<8x128xf32>
    %cst_18 = arith.constant 1.000000e+00 : f32
    %26 = vector.broadcast %cst_18 : f32 to vector<8x128xf32>
    %27 = arith.addf %26, %25 : vector<8x128xf32>
    %28 = arith.divf %26, %27 : vector<8x128xf32>
    %29 = vector.extract_strided_slice %16 {offsets = [0, 256], sizes = [8, 128], strides = [1, 1]} : vector<8x512xf32> to vector<8x128xf32>
    %30 = math.tanh %29 : vector<8x128xf32>
    %31 = vector.extract_strided_slice %16 {offsets = [0, 384], sizes = [8, 128], strides = [1, 1]} : vector<8x512xf32> to vector<8x128xf32>
    %32 = arith.negf %31 : vector<8x128xf32>
    %33 = math.exp %32 : vector<8x128xf32>
    %cst_19 = arith.constant 1.000000e+00 : f32
    %34 = vector.broadcast %cst_19 : f32 to vector<8x128xf32>
    %35 = arith.addf %34, %33 : vector<8x128xf32>
    %36 = arith.divf %34, %35 : vector<8x128xf32>
    %37 = arith.mulf %28, %11 : vector<8x128xf32>
    %38 = arith.mulf %22, %30 : vector<8x128xf32>
    %39 = arith.addf %37, %38 : vector<8x128xf32>
    %40 = math.tanh %39 : vector<8x128xf32>
    %41 = arith.mulf %36, %40 : vector<8x128xf32>
    %c0_20 = arith.constant 0 : index
    %c0_21 = arith.constant 0 : index
    %42 = vector.load %arg13[%c0_20, %c0_21] : memref<64x128xf32, #tpu.memory_space<vmem>>, vector<8x128xf32>
    tpu.vector_store %arg13[%c0_20, %c0_21], %41 {strides = array<i32>} : memref<64x128xf32, #tpu.memory_space<vmem>>, vector<8x128xf32>,
    %c8 = arith.constant 8 : index
    %c0_22 = arith.constant 0 : index
    %43 = vector.load %arg12[%c8, %c0_22] : memref<64x512xf32, #tpu.memory_space<vmem>>, vector<8x512xf32>
    %44 = arith.truncf %41 : vector<8x128xf32> to vector<8x128xbf16>
    %cst_23 = arith.constant dense<0.000000e+00> : vector<8x512xf32>
    %45 = tpu.matmul %44, %12, %cst_23 {dimension_numbers = #tpu.dot_dimension_numbers<[1], [0], [0], [1], [0, 0, 1, 1], [], []>} : vector<8x128xbf16>, vector<128x512xbf16>, vector<8x512xf32> -> vector<8x512xf32>
    %46 = arith.addf %43, %45 : vector<8x512xf32>
    %47 = vector.extract_strided_slice %46 {offsets = [0, 0], sizes = [8, 128], strides = [1, 1]} : vector<8x512xf32> to vector<8x128xf32>
    %48 = arith.negf %47 : vector<8x128xf32>
    %49 = math.exp %48 : vector<8x128xf32>
    %cst_24 = arith.constant 1.000000e+00 : f32
    %50 = vector.broadcast %cst_24 : f32 to vector<8x128xf32>
    %51 = arith.addf %50, %49 : vector<8x128xf32>
    %52 = arith.divf %50, %51 : vector<8x128xf32>
    %53 = vector.extract_strided_slice %46 {offsets = [0, 128], sizes = [8, 128], strides = [1, 1]} : vector<8x512xf32> to vector<8x128xf32>
    %54 = arith.negf %53 : vector<8x128xf32>
    %55 = math.exp %54 : vector<8x128xf32>
    %cst_25 = arith.constant 1.000000e+00 : f32
    %56 = vector.broadcast %cst_25 : f32 to vector<8x128xf32>
    %57 = arith.addf %56, %55 : vector<8x128xf32>
    %58 = arith.divf %56, %57 : vector<8x128xf32>
    %59 = vector.extract_strided_slice %46 {offsets = [0, 256], sizes = [8, 128], strides = [1, 1]} : vector<8x512xf32> to vector<8x128xf32>
    %60 = math.tanh %59 : vector<8x128xf32>
    %61 = vector.extract_strided_slice %46 {offsets = [0, 384], sizes = [8, 128], strides = [1, 1]} : vector<8x512xf32> to vector<8x128xf32>
    %62 = arith.negf %61 : vector<8x128xf32>
    %63 = math.exp %62 : vector<8x128xf32>
    %cst_26 = arith.constant 1.000000e+00 : f32
    %64 = vector.broadcast %cst_26 : f32 to vector<8x128xf32>
    %65 = arith.addf %64, %63 : vector<8x128xf32>
    %66 = arith.divf %64, %65 : vector<8x128xf32>
    %67 = arith.mulf %58, %39 : vector<8x128xf32>
    %68 = arith.mulf %52, %60 : vector<8x128xf32>
    %69 = arith.addf %67, %68 : vector<8x128xf32>
    %70 = math.tanh %69 : vector<8x128xf32>
    %71 = arith.mulf %66, %70 : vector<8x128xf32>
    %c8_27 = arith.constant 8 : index
    %c0_28 = arith.constant 0 : index
    %72 = vector.load %arg13[%c8_27, %c0_28] : memref<64x128xf32, #tpu.memory_space<vmem>>, vector<8x128xf32>
    tpu.vector_store %arg13[%c8_27, %c0_28], %71 {strides = array<i32>} : memref<64x128xf32, #tpu.memory_space<vmem>>, vector<8x128xf32>,
    %c16 = arith.constant 16 : index
    %c0_29 = arith.constant 0 : index
    %73 = vector.load %arg12[%c16, %c0_29] : memref<64x512xf32, #tpu.memory_space<vmem>>, vector<8x512xf32>
    %74 = arith.truncf %71 : vector<8x128xf32> to vector<8x128xbf16>
    %cst_30 = arith.constant dense<0.000000e+00> : vector<8x512xf32>
    %75 = tpu.matmul %74, %12, %cst_30 {dimension_numbers = #tpu.dot_dimension_numbers<[1], [0], [0], [1], [0, 0, 1, 1], [], []>} : vector<8x128xbf16>, vector<128x512xbf16>, vector<8x512xf32> -> vector<8x512xf32>
    %76 = arith.addf %73, %75 : vector<8x512xf32>
    %77 = vector.extract_strided_slice %76 {offsets = [0, 0], sizes = [8, 128], strides = [1, 1]} : vector<8x512xf32> to vector<8x128xf32>
    %78 = arith.negf %77 : vector<8x128xf32>
    %79 = math.exp %78 : vector<8x128xf32>
    %cst_31 = arith.constant 1.000000e+00 : f32
    %80 = vector.broadcast %cst_31 : f32 to vector<8x128xf32>
    %81 = arith.addf %80, %79 : vector<8x128xf32>
    %82 = arith.divf %80, %81 : vector<8x128xf32>
    %83 = vector.extract_strided_slice %76 {offsets = [0, 128], sizes = [8, 128], strides = [1, 1]} : vector<8x512xf32> to vector<8x128xf32>
    %84 = arith.negf %83 : vector<8x128xf32>
    %85 = math.exp %84 : vector<8x128xf32>
    %cst_32 = arith.constant 1.000000e+00 : f32
    %86 = vector.broadcast %cst_32 : f32 to vector<8x128xf32>
    %87 = arith.addf %86, %85 : vector<8x128xf32>
    %88 = arith.divf %86, %87 : vector<8x128xf32>
    %89 = vector.extract_strided_slice %76 {offsets = [0, 256], sizes = [8, 128], strides = [1, 1]} : vector<8x512xf32> to vector<8x128xf32>
    %90 = math.tanh %89 : vector<8x128xf32>
    %91 = vector.extract_strided_slice %76 {offsets = [0, 384], sizes = [8, 128], strides = [1, 1]} : vector<8x512xf32> to vector<8x128xf32>
    %92 = arith.negf %91 : vector<8x128xf32>
    %93 = math.exp %92 : vector<8x128xf32>
    %cst_33 = arith.constant 1.000000e+00 : f32
    %94 = vector.broadcast %cst_33 : f32 to vector<8x128xf32>
    %95 = arith.addf %94, %93 : vector<8x128xf32>
    %96 = arith.divf %94, %95 : vector<8x128xf32>
    %97 = arith.mulf %88, %69 : vector<8x128xf32>
    %98 = arith.mulf %82, %90 : vector<8x128xf32>
    %99 = arith.addf %97, %98 : vector<8x128xf32>
    %100 = math.tanh %99 : vector<8x128xf32>
    %101 = arith.mulf %96, %100 : vector<8x128xf32>
    %c16_34 = arith.constant 16 : index
    %c0_35 = arith.constant 0 : index
    %102 = vector.load %arg13[%c16_34, %c0_35] : memref<64x128xf32, #tpu.memory_space<vmem>>, vector<8x128xf32>
    tpu.vector_store %arg13[%c16_34, %c0_35], %101 {strides = array<i32>} : memref<64x128xf32, #tpu.memory_space<vmem>>, vector<8x128xf32>,
    %c24 = arith.constant 24 : index
    %c0_36 = arith.constant 0 : index
    %103 = vector.load %arg12[%c24, %c0_36] : memref<64x512xf32, #tpu.memory_space<vmem>>, vector<8x512xf32>
    %104 = arith.truncf %101 : vector<8x128xf32> to vector<8x128xbf16>
    %cst_37 = arith.constant dense<0.000000e+00> : vector<8x512xf32>
    %105 = tpu.matmul %104, %12, %cst_37 {dimension_numbers = #tpu.dot_dimension_numbers<[1], [0], [0], [1], [0, 0, 1, 1], [], []>} : vector<8x128xbf16>, vector<128x512xbf16>, vector<8x512xf32> -> vector<8x512xf32>
    %106 = arith.addf %103, %105 : vector<8x512xf32>
    %107 = vector.extract_strided_slice %106 {offsets = [0, 0], sizes = [8, 128], strides = [1, 1]} : vector<8x512xf32> to vector<8x128xf32>
    %108 = arith.negf %107 : vector<8x128xf32>
    %109 = math.exp %108 : vector<8x128xf32>
    %cst_38 = arith.constant 1.000000e+00 : f32
    %110 = vector.broadcast %cst_38 : f32 to vector<8x128xf32>
    %111 = arith.addf %110, %109 : vector<8x128xf32>
    %112 = arith.divf %110, %111 : vector<8x128xf32>
    %113 = vector.extract_strided_slice %106 {offsets = [0, 128], sizes = [8, 128], strides = [1, 1]} : vector<8x512xf32> to vector<8x128xf32>
    %114 = arith.negf %113 : vector<8x128xf32>
    %115 = math.exp %114 : vector<8x128xf32>
    %cst_39 = arith.constant 1.000000e+00 : f32
    %116 = vector.broadcast %cst_39 : f32 to vector<8x128xf32>
    %117 = arith.addf %116, %115 : vector<8x128xf32>
    %118 = arith.divf %116, %117 : vector<8x128xf32>
    %119 = vector.extract_strided_slice %106 {offsets = [0, 256], sizes = [8, 128], strides = [1, 1]} : vector<8x512xf32> to vector<8x128xf32>
    %120 = math.tanh %119 : vector<8x128xf32>
    %121 = vector.extract_strided_slice %106 {offsets = [0, 384], sizes = [8, 128], strides = [1, 1]} : vector<8x512xf32> to vector<8x128xf32>
    %122 = arith.negf %121 : vector<8x128xf32>
    %123 = math.exp %122 : vector<8x128xf32>
    %cst_40 = arith.constant 1.000000e+00 : f32
    %124 = vector.broadcast %cst_40 : f32 to vector<8x128xf32>
    %125 = arith.addf %124, %123 : vector<8x128xf32>
    %126 = arith.divf %124, %125 : vector<8x128xf32>
    %127 = arith.mulf %118, %99 : vector<8x128xf32>
    %128 = arith.mulf %112, %120 : vector<8x128xf32>
    %129 = arith.addf %127, %128 : vector<8x128xf32>
    %130 = math.tanh %129 : vector<8x128xf32>
    %131 = arith.mulf %126, %130 : vector<8x128xf32>
    %c24_41 = arith.constant 24 : index
    %c0_42 = arith.constant 0 : index
    %132 = vector.load %arg13[%c24_41, %c0_42] : memref<64x128xf32, #tpu.memory_space<vmem>>, vector<8x128xf32>
    tpu.vector_store %arg13[%c24_41, %c0_42], %131 {strides = array<i32>} : memref<64x128xf32, #tpu.memory_space<vmem>>, vector<8x128xf32>,
    %c32 = arith.constant 32 : index
    %c0_43 = arith.constant 0 : index
    %133 = vector.load %arg12[%c32, %c0_43] : memref<64x512xf32, #tpu.memory_space<vmem>>, vector<8x512xf32>
    %134 = arith.truncf %131 : vector<8x128xf32> to vector<8x128xbf16>
    %cst_44 = arith.constant dense<0.000000e+00> : vector<8x512xf32>
    %135 = tpu.matmul %134, %12, %cst_44 {dimension_numbers = #tpu.dot_dimension_numbers<[1], [0], [0], [1], [0, 0, 1, 1], [], []>} : vector<8x128xbf16>, vector<128x512xbf16>, vector<8x512xf32> -> vector<8x512xf32>
    %136 = arith.addf %133, %135 : vector<8x512xf32>
    %137 = vector.extract_strided_slice %136 {offsets = [0, 0], sizes = [8, 128], strides = [1, 1]} : vector<8x512xf32> to vector<8x128xf32>
    %138 = arith.negf %137 : vector<8x128xf32>
    %139 = math.exp %138 : vector<8x128xf32>
    %cst_45 = arith.constant 1.000000e+00 : f32
    %140 = vector.broadcast %cst_45 : f32 to vector<8x128xf32>
    %141 = arith.addf %140, %139 : vector<8x128xf32>
    %142 = arith.divf %140, %141 : vector<8x128xf32>
    %143 = vector.extract_strided_slice %136 {offsets = [0, 128], sizes = [8, 128], strides = [1, 1]} : vector<8x512xf32> to vector<8x128xf32>
    %144 = arith.negf %143 : vector<8x128xf32>
    %145 = math.exp %144 : vector<8x128xf32>
    %cst_46 = arith.constant 1.000000e+00 : f32
    %146 = vector.broadcast %cst_46 : f32 to vector<8x128xf32>
    %147 = arith.addf %146, %145 : vector<8x128xf32>
    %148 = arith.divf %146, %147 : vector<8x128xf32>
    %149 = vector.extract_strided_slice %136 {offsets = [0, 256], sizes = [8, 128], strides = [1, 1]} : vector<8x512xf32> to vector<8x128xf32>
    %150 = math.tanh %149 : vector<8x128xf32>
    %151 = vector.extract_strided_slice %136 {offsets = [0, 384], sizes = [8, 128], strides = [1, 1]} : vector<8x512xf32> to vector<8x128xf32>
    %152 = arith.negf %151 : vector<8x128xf32>
    %153 = math.exp %152 : vector<8x128xf32>
    %cst_47 = arith.constant 1.000000e+00 : f32
    %154 = vector.broadcast %cst_47 : f32 to vector<8x128xf32>
    %155 = arith.addf %154, %153 : vector<8x128xf32>
    %156 = arith.divf %154, %155 : vector<8x128xf32>
    %157 = arith.mulf %148, %129 : vector<8x128xf32>
    %158 = arith.mulf %142, %150 : vector<8x128xf32>
    %159 = arith.addf %157, %158 : vector<8x128xf32>
    %160 = math.tanh %159 : vector<8x128xf32>
    %161 = arith.mulf %156, %160 : vector<8x128xf32>
    %c32_48 = arith.constant 32 : index
    %c0_49 = arith.constant 0 : index
    %162 = vector.load %arg13[%c32_48, %c0_49] : memref<64x128xf32, #tpu.memory_space<vmem>>, vector<8x128xf32>
    tpu.vector_store %arg13[%c32_48, %c0_49], %161 {strides = array<i32>} : memref<64x128xf32, #tpu.memory_space<vmem>>, vector<8x128xf32>,
    %c40 = arith.constant 40 : index
    %c0_50 = arith.constant 0 : index
    %163 = vector.load %arg12[%c40, %c0_50] : memref<64x512xf32, #tpu.memory_space<vmem>>, vector<8x512xf32>
    %164 = arith.truncf %161 : vector<8x128xf32> to vector<8x128xbf16>
    %cst_51 = arith.constant dense<0.000000e+00> : vector<8x512xf32>
    %165 = tpu.matmul %164, %12, %cst_51 {dimension_numbers = #tpu.dot_dimension_numbers<[1], [0], [0], [1], [0, 0, 1, 1], [], []>} : vector<8x128xbf16>, vector<128x512xbf16>, vector<8x512xf32> -> vector<8x512xf32>
    %166 = arith.addf %163, %165 : vector<8x512xf32>
    %167 = vector.extract_strided_slice %166 {offsets = [0, 0], sizes = [8, 128], strides = [1, 1]} : vector<8x512xf32> to vector<8x128xf32>
    %168 = arith.negf %167 : vector<8x128xf32>
    %169 = math.exp %168 : vector<8x128xf32>
    %cst_52 = arith.constant 1.000000e+00 : f32
    %170 = vector.broadcast %cst_52 : f32 to vector<8x128xf32>
    %171 = arith.addf %170, %169 : vector<8x128xf32>
    %172 = arith.divf %170, %171 : vector<8x128xf32>
    %173 = vector.extract_strided_slice %166 {offsets = [0, 128], sizes = [8, 128], strides = [1, 1]} : vector<8x512xf32> to vector<8x128xf32>
    %174 = arith.negf %173 : vector<8x128xf32>
    %175 = math.exp %174 : vector<8x128xf32>
    %cst_53 = arith.constant 1.000000e+00 : f32
    %176 = vector.broadcast %cst_53 : f32 to vector<8x128xf32>
    %177 = arith.addf %176, %175 : vector<8x128xf32>
    %178 = arith.divf %176, %177 : vector<8x128xf32>
    %179 = vector.extract_strided_slice %166 {offsets = [0, 256], sizes = [8, 128], strides = [1, 1]} : vector<8x512xf32> to vector<8x128xf32>
    %180 = math.tanh %179 : vector<8x128xf32>
    %181 = vector.extract_strided_slice %166 {offsets = [0, 384], sizes = [8, 128], strides = [1, 1]} : vector<8x512xf32> to vector<8x128xf32>
    %182 = arith.negf %181 : vector<8x128xf32>
    %183 = math.exp %182 : vector<8x128xf32>
    %cst_54 = arith.constant 1.000000e+00 : f32
    %184 = vector.broadcast %cst_54 : f32 to vector<8x128xf32>
    %185 = arith.addf %184, %183 : vector<8x128xf32>
    %186 = arith.divf %184, %185 : vector<8x128xf32>
    %187 = arith.mulf %178, %159 : vector<8x128xf32>
    %188 = arith.mulf %172, %180 : vector<8x128xf32>
    %189 = arith.addf %187, %188 : vector<8x128xf32>
    %190 = math.tanh %189 : vector<8x128xf32>
    %191 = arith.mulf %186, %190 : vector<8x128xf32>
    %c40_55 = arith.constant 40 : index
    %c0_56 = arith.constant 0 : index
    %192 = vector.load %arg13[%c40_55, %c0_56] : memref<64x128xf32, #tpu.memory_space<vmem>>, vector<8x128xf32>
    tpu.vector_store %arg13[%c40_55, %c0_56], %191 {strides = array<i32>} : memref<64x128xf32, #tpu.memory_space<vmem>>, vector<8x128xf32>,
    %c48 = arith.constant 48 : index
    %c0_57 = arith.constant 0 : index
    %193 = vector.load %arg12[%c48, %c0_57] : memref<64x512xf32, #tpu.memory_space<vmem>>, vector<8x512xf32>
    %194 = arith.truncf %191 : vector<8x128xf32> to vector<8x128xbf16>
    %cst_58 = arith.constant dense<0.000000e+00> : vector<8x512xf32>
    %195 = tpu.matmul %194, %12, %cst_58 {dimension_numbers = #tpu.dot_dimension_numbers<[1], [0], [0], [1], [0, 0, 1, 1], [], []>} : vector<8x128xbf16>, vector<128x512xbf16>, vector<8x512xf32> -> vector<8x512xf32>
    %196 = arith.addf %193, %195 : vector<8x512xf32>
    %197 = vector.extract_strided_slice %196 {offsets = [0, 0], sizes = [8, 128], strides = [1, 1]} : vector<8x512xf32> to vector<8x128xf32>
    %198 = arith.negf %197 : vector<8x128xf32>
    %199 = math.exp %198 : vector<8x128xf32>
    %cst_59 = arith.constant 1.000000e+00 : f32
    %200 = vector.broadcast %cst_59 : f32 to vector<8x128xf32>
    %201 = arith.addf %200, %199 : vector<8x128xf32>
    %202 = arith.divf %200, %201 : vector<8x128xf32>
    %203 = vector.extract_strided_slice %196 {offsets = [0, 128], sizes = [8, 128], strides = [1, 1]} : vector<8x512xf32> to vector<8x128xf32>
    %204 = arith.negf %203 : vector<8x128xf32>
    %205 = math.exp %204 : vector<8x128xf32>
    %cst_60 = arith.constant 1.000000e+00 : f32
    %206 = vector.broadcast %cst_60 : f32 to vector<8x128xf32>
    %207 = arith.addf %206, %205 : vector<8x128xf32>
    %208 = arith.divf %206, %207 : vector<8x128xf32>
    %209 = vector.extract_strided_slice %196 {offsets = [0, 256], sizes = [8, 128], strides = [1, 1]} : vector<8x512xf32> to vector<8x128xf32>
    %210 = math.tanh %209 : vector<8x128xf32>
    %211 = vector.extract_strided_slice %196 {offsets = [0, 384], sizes = [8, 128], strides = [1, 1]} : vector<8x512xf32> to vector<8x128xf32>
    %212 = arith.negf %211 : vector<8x128xf32>
    %213 = math.exp %212 : vector<8x128xf32>
    %cst_61 = arith.constant 1.000000e+00 : f32
    %214 = vector.broadcast %cst_61 : f32 to vector<8x128xf32>
    %215 = arith.addf %214, %213 : vector<8x128xf32>
    %216 = arith.divf %214, %215 : vector<8x128xf32>
    %217 = arith.mulf %208, %189 : vector<8x128xf32>
    %218 = arith.mulf %202, %210 : vector<8x128xf32>
    %219 = arith.addf %217, %218 : vector<8x128xf32>
    %220 = math.tanh %219 : vector<8x128xf32>
    %221 = arith.mulf %216, %220 : vector<8x128xf32>
    %c48_62 = arith.constant 48 : index
    %c0_63 = arith.constant 0 : index
    %222 = vector.load %arg13[%c48_62, %c0_63] : memref<64x128xf32, #tpu.memory_space<vmem>>, vector<8x128xf32>
    tpu.vector_store %arg13[%c48_62, %c0_63], %221 {strides = array<i32>} : memref<64x128xf32, #tpu.memory_space<vmem>>, vector<8x128xf32>,
    %c56 = arith.constant 56 : index
    %c0_64 = arith.constant 0 : index
    %223 = vector.load %arg12[%c56, %c0_64] : memref<64x512xf32, #tpu.memory_space<vmem>>, vector<8x512xf32>
    %224 = arith.truncf %221 : vector<8x128xf32> to vector<8x128xbf16>
    %cst_65 = arith.constant dense<0.000000e+00> : vector<8x512xf32>
    %225 = tpu.matmul %224, %12, %cst_65 {dimension_numbers = #tpu.dot_dimension_numbers<[1], [0], [0], [1], [0, 0, 1, 1], [], []>} : vector<8x128xbf16>, vector<128x512xbf16>, vector<8x512xf32> -> vector<8x512xf32>
    %226 = arith.addf %223, %225 : vector<8x512xf32>
    %227 = vector.extract_strided_slice %226 {offsets = [0, 0], sizes = [8, 128], strides = [1, 1]} : vector<8x512xf32> to vector<8x128xf32>
    %228 = arith.negf %227 : vector<8x128xf32>
    %229 = math.exp %228 : vector<8x128xf32>
    %cst_66 = arith.constant 1.000000e+00 : f32
    %230 = vector.broadcast %cst_66 : f32 to vector<8x128xf32>
    %231 = arith.addf %230, %229 : vector<8x128xf32>
    %232 = arith.divf %230, %231 : vector<8x128xf32>
    %233 = vector.extract_strided_slice %226 {offsets = [0, 128], sizes = [8, 128], strides = [1, 1]} : vector<8x512xf32> to vector<8x128xf32>
    %234 = arith.negf %233 : vector<8x128xf32>
    %235 = math.exp %234 : vector<8x128xf32>
    %cst_67 = arith.constant 1.000000e+00 : f32
    %236 = vector.broadcast %cst_67 : f32 to vector<8x128xf32>
    %237 = arith.addf %236, %235 : vector<8x128xf32>
    %238 = arith.divf %236, %237 : vector<8x128xf32>
    %239 = vector.extract_strided_slice %226 {offsets = [0, 256], sizes = [8, 128], strides = [1, 1]} : vector<8x512xf32> to vector<8x128xf32>
    %240 = math.tanh %239 : vector<8x128xf32>
    %241 = vector.extract_strided_slice %226 {offsets = [0, 384], sizes = [8, 128], strides = [1, 1]} : vector<8x512xf32> to vector<8x128xf32>
    %242 = arith.negf %241 : vector<8x128xf32>
    %243 = math.exp %242 : vector<8x128xf32>
    %cst_68 = arith.constant 1.000000e+00 : f32
    %244 = vector.broadcast %cst_68 : f32 to vector<8x128xf32>
    %245 = arith.addf %244, %243 : vector<8x128xf32>
    %246 = arith.divf %244, %245 : vector<8x128xf32>
    %247 = arith.mulf %238, %219 : vector<8x128xf32>
    %248 = arith.mulf %232, %240 : vector<8x128xf32>
    %249 = arith.addf %247, %248 : vector<8x128xf32>
    %250 = math.tanh %249 : vector<8x128xf32>
    %251 = arith.mulf %246, %250 : vector<8x128xf32>
    %c56_69 = arith.constant 56 : index
    %c0_70 = arith.constant 0 : index
    %252 = vector.load %arg13[%c56_69, %c0_70] : memref<64x128xf32, #tpu.memory_space<vmem>>, vector<8x128xf32>
    tpu.vector_store %arg13[%c56_69, %c0_70], %251 {strides = array<i32>} : memref<64x128xf32, #tpu.memory_space<vmem>>, vector<8x128xf32>,
    %c0_71 = arith.constant 0 : index
    %c0_72 = arith.constant 0 : index
    %253 = vector.load %arg14[%c0_71, %c0_72] : memref<8x128xf32, #tpu.memory_space<vmem>>, vector<8x128xf32>
    tpu.vector_store %arg14[%c0_71, %c0_72], %251 {strides = array<i32>} : memref<8x128xf32, #tpu.memory_space<vmem>>, vector<8x128xf32>,
    %c0_73 = arith.constant 0 : index
    %c0_74 = arith.constant 0 : index
    %254 = vector.load %arg15[%c0_73, %c0_74] : memref<8x128xf32, #tpu.memory_space<vmem>>, vector<8x128xf32>
    tpu.vector_store %arg15[%c0_73, %c0_74], %249 {strides = array<i32>} : memref<8x128xf32, #tpu.memory_space<vmem>>, vector<8x128xf32>,
    %c0_75 = arith.constant 0 : index
    %c0_76 = arith.constant 0 : index
    %255 = vector.load %arg10[%c0_75, %c0_76] : memref<8x128xf32, #tpu.memory_space<vmem>>, vector<8x128xf32>
    tpu.vector_store %arg10[%c0_75, %c0_76], %251 {strides = array<i32>} : memref<8x128xf32, #tpu.memory_space<vmem>>, vector<8x128xf32>,
    %c0_77 = arith.constant 0 : index
    %c0_78 = arith.constant 0 : index
    %256 = vector.load %arg11[%c0_77, %c0_78] : memref<8x128xf32, #tpu.memory_space<vmem>>, vector<8x128xf32>
    tpu.vector_store %arg11[%c0_77, %c0_78], %249 {strides = array<i32>} : memref<8x128xf32, #tpu.memory_space<vmem>>, vector<8x128xf32>,
    %c0_79 = arith.constant 0 : index
    %c0_80 = arith.constant 0 : index
    %257 = vector.load %arg13[%c0_79, %c0_80] : memref<64x128xf32, #tpu.memory_space<vmem>>, vector<64x128xf32>
    %258 = arith.truncf %257 : vector<64x128xf32> to vector<64x128xbf16>
    %c0_81 = arith.constant 0 : index
    %c0_82 = arith.constant 0 : index
    %259 = vector.load %arg7[%c0_81, %c0_82] : memref<128x256xbf16, #tpu.memory_space<vmem>>, vector<128x256xbf16>
    %cst_83 = arith.constant dense<0.000000e+00> : vector<64x256xf32>
    %260 = tpu.matmul %258, %259, %cst_83 {dimension_numbers = #tpu.dot_dimension_numbers<[1], [0], [0], [1], [0, 0, 1, 1], [], []>} : vector<64x128xbf16>, vector<128x256xbf16>, vector<64x256xf32> -> vector<64x256xf32>
    %c0_84 = arith.constant 0 : index
    %c0_85 = arith.constant 0 : index
    %261 = vector.load %arg8[%c0_84, %c0_85] : memref<1x256xf32, #tpu.memory_space<vmem>>, vector<1x256xf32>
    %262 = vector.broadcast %261 : vector<1x256xf32> to vector<64x256xf32>
    %263 = arith.addf %260, %262 : vector<64x256xf32>
    %c0_86 = arith.constant 0 : index
    %c0_87 = arith.constant 0 : index
    %264 = vector.load %arg9[%c0_86, %c0_87] : memref<64x256xf32, #tpu.memory_space<vmem>>, vector<64x256xf32>
    tpu.vector_store %arg9[%c0_86, %c0_87], %263 {strides = array<i32>} : memref<64x256xf32, #tpu.memory_space<vmem>>, vector<64x256xf32>,
    return
  }
  func.func @transform_0(%arg0: i32) -> (i32, i32) {
    %c0_i32 = arith.constant 0 : i32
    %c0_i32_0 = arith.constant 0 : i32
    return %arg0, %c0_i32 : i32, i32
  }
  func.func @transform_1(%arg0: i32) -> (i32, i32) {
    %c0_i32 = arith.constant 0 : i32
    %c0_i32_0 = arith.constant 0 : i32
    %c0_i32_1 = arith.constant 0 : i32
    return %c0_i32, %c0_i32_0 : i32, i32
  }
  func.func @transform_2(%arg0: i32) -> (i32, i32) {
    %c0_i32 = arith.constant 0 : i32
    %c0_i32_0 = arith.constant 0 : i32
    %c0_i32_1 = arith.constant 0 : i32
    return %c0_i32, %c0_i32_0 : i32, i32
  }
  func.func @transform_3(%arg0: i32) -> (i32, i32) {
    %c0_i32 = arith.constant 0 : i32
    %c0_i32_0 = arith.constant 0 : i32
    %c0_i32_1 = arith.constant 0 : i32
    return %c0_i32, %c0_i32_0 : i32, i32
  }
  func.func @transform_4(%arg0: i32) -> (i32, i32) {
    %c0_i32 = arith.constant 0 : i32
    %c0_i32_0 = arith.constant 0 : i32
    %c0_i32_1 = arith.constant 0 : i32
    return %c0_i32, %c0_i32_0 : i32, i32
  }
  func.func @transform_5(%arg0: i32) -> (i32, i32) {
    %c0_i32 = arith.constant 0 : i32
    %c0_i32_0 = arith.constant 0 : i32
    %c0_i32_1 = arith.constant 0 : i32
    return %c0_i32, %c0_i32_0 : i32, i32
  }
  func.func @transform_6(%arg0: i32) -> (i32, i32) {
    %c0_i32 = arith.constant 0 : i32
    %c0_i32_0 = arith.constant 0 : i32
    %c0_i32_1 = arith.constant 0 : i32
    return %c0_i32, %c0_i32_0 : i32, i32
  }
  func.func @transform_7(%arg0: i32) -> (i32, i32) {
    %c0_i32 = arith.constant 0 : i32
    %c0_i32_0 = arith.constant 0 : i32
    %c0_i32_1 = arith.constant 0 : i32
    return %c0_i32, %c0_i32_0 : i32, i32
  }
  func.func @transform_8(%arg0: i32) -> (i32, i32) {
    %c0_i32 = arith.constant 0 : i32
    %c0_i32_0 = arith.constant 0 : i32
    return %arg0, %c0_i32 : i32, i32
  }
  func.func @transform_9(%arg0: i32) -> (i32, i32) {
    %c0_i32 = arith.constant 0 : i32
    %c0_i32_0 = arith.constant 0 : i32
    %c0_i32_1 = arith.constant 0 : i32
    return %c0_i32, %c0_i32_0 : i32, i32
  }
  func.func @transform_10(%arg0: i32) -> (i32, i32) {
    %c0_i32 = arith.constant 0 : i32
    %c0_i32_0 = arith.constant 0 : i32
    %c0_i32_1 = arith.constant 0 : i32
    return %c0_i32, %c0_i32_0 : i32, i32
  }
}

</mosaic_0001>

<llo_original>
// kernel: my_lstm_forward.1
$region0: #{my_lstm_forward.1}
  #allocation0 [shape = 'u32[]', space=smem, size = 0x4, offset = 0x4, fixed_abs, tag = 'smem constant byte address 0x4 - core index']
  #allocation1 [shape = 'u32[72,128]{1,0:T(1,128)}', space=vmem, size = 0x9000, scoped, tag = 'internal scratch']
  #allocation2 [shape = 'f32[64,512]{1,0:T(8,128)}', space=vmem, size = 0x20000, scoped, tag = 'scratch operand']
  #allocation3 [shape = 'f32[64,128]{1,0:T(8,128)}', space=vmem, size = 0x8000, scoped, tag = 'scratch operand']
  #allocation4 [shape = 'f32[8,128]{1,0:T(8,128)}', space=vmem, size = 0x1000, scoped, tag = 'scratch operand']
  #allocation5 [shape = 'f32[8,128]{1,0:T(8,128)}', space=vmem, size = 0x1000, scoped, tag = 'scratch operand']
  %s0 = inlined_call_operand.vmem [shape: bf16[64,128], index: 0, kind: input, shape index: {}]
  %s1 = inlined_call_operand.vmem [shape: f32[8,128], index: 1, kind: input, shape index: {}]
  %s2 = inlined_call_operand.vmem [shape: f32[8,128], index: 2, kind: input, shape index: {}]
  %s3 = inlined_call_operand.vmem [shape: bf16[128,512], index: 3, kind: input, shape index: {}]
  %s4 = inlined_call_operand.hbm [shape: bf16[128,512], index: 4, kind: input, shape index: {}]
  %s5 = inlined_call_operand.vmem [shape: f32[1,512], index: 5, kind: input, shape index: {}]
  %s6 = inlined_call_operand.vmem [shape: bf16[128,256], index: 6, kind: input, shape index: {}]
  %s7 = inlined_call_operand.vmem [shape: f32[1,256], index: 7, kind: input, shape index: {}]
  %s8 = inlined_call_operand.hbm [shape: f32[64,256], index: 8, kind: output, shape index: {0}]
  %s9 = inlined_call_operand.hbm [shape: f32[8,128], index: 9, kind: output, shape index: {1}]
  %s10 = inlined_call_operand.hbm [shape: f32[8,128], index: 10, kind: output, shape index: {2}]
  %11 = xla_tuple %s8, %s9, %s10
  %s12 = sld [smem:[#allocation0]]
  $region66: #{my_lstm_forward.1} parent=0
    _
  %s14 = ssub.s32 1, %s12
  %s15 = scalar_select 0, %s14, %s12
  $region1: #{my_lstm_forward.1} parent=0
    #allocation6 [shape = 'u8[131072]{0}', space=vmem, size = 0x20000, scoped, tag = 'input window, operand 4, single buffered']
    #allocation7 [shape = 's32[1]{0}', space=sflag, size = 0x4, scoped, tag = 'scoped memory for my_lstm_forward.1']
    #allocation8 [shape = 's32[1]{0}', space=sflag, size = 0x4, scoped, tag = 'scoped memory for my_lstm_forward.1']
    #allocation9 [shape = 'u8[65536]{0}', space=vmem, size = 0x10000, scoped, tag = 'output window, operand 0, single buffered']
    #allocation10 [shape = 'u8[4096]{0}', space=vmem, size = 0x1000, scoped, tag = 'output window, operand 1, single buffered']
    #allocation11 [shape = 's32[1]{0}', space=sflag, size = 0x4, scoped, tag = 'scoped memory for my_lstm_forward.1']
    #allocation12 [shape = 'u8[4096]{0}', space=vmem, size = 0x1000, scoped, tag = 'output window, operand 2, single buffered']
    %16 = vsyncpa [#allocation7], 0
    %17 = vsyncpa [#allocation8], 0
    %18 = vsyncpa [#allocation11], 0
    // Predicated region
    $region2: #{my_lstm_forward.1} parent=1 // pred_check
      _
    $region3: #{my_lstm_forward.1} parent=1 // pred_check_branch
      %20 = sbr.rel (0) target = $region5
    $region4: #{my_lstm_forward.1} parent=1 // pred_region
      _
    $region5: #{my_lstm_forward.1} parent=1 // pred_fallthru
      _
    // Predicated region
    $region6: #{my_lstm_forward.1} parent=1 // pred_check
      _
    $region7: #{my_lstm_forward.1} parent=1 // pred_check_branch
      %22 = sbr.rel (0) target = $region9
    $region8: #{my_lstm_forward.1} parent=1 // pred_region
      _
    $region9: #{my_lstm_forward.1} parent=1 // pred_fallthru
      _
    // Predicated region
    $region10: #{my_lstm_forward.1} parent=1 // pred_check
      _
    $region11: #{my_lstm_forward.1} parent=1 // pred_check_branch
      %24 = sbr.rel (0) target = $region13
    $region12: #{my_lstm_forward.1} parent=1 // pred_region
      _
    $region13: #{my_lstm_forward.1} parent=1 // pred_fallthru
      _
    // Predicated region
    $region14: #{my_lstm_forward.1} parent=1 // pred_check
      _
    $region15: #{my_lstm_forward.1} parent=1 // pred_check_branch
      %26 = sbr.rel (0) target = $region17
    $region16: #{my_lstm_forward.1} parent=1 // pred_region
      _
    $region17: #{my_lstm_forward.1} parent=1 // pred_fallthru
      _
    // Predicated region
    $region18: #{my_lstm_forward.1} parent=1 // pred_check
      _
    $region19: #{my_lstm_forward.1} parent=1 // pred_check_branch
      %28 = sbr.rel (0) target = $region21
    $region20: #{my_lstm_forward.1} parent=1 // pred_region
      %30 = vsyncadd [#allocation7], 0
      %s31 = sshll.u32 %s4, 4
      %s32 = int_to_ptr.hbm [resolvable:$true] %s31
      %s33 = sshll.u32 [#allocation6], 4
      %s34 = int_to_ptr.vmem [resolvable:$true] %s33
      %39 = dma.hbm_to_vmem [thread:$0]  %s32, 4096, %s34, [#allocation7], 256, 256, 16
    $region21: #{my_lstm_forward.1} parent=1 // pred_fallthru
      _
    // Predicated region
    $region22: #{my_lstm_forward.1} parent=1 // pred_check
      _
    $region23: #{my_lstm_forward.1} parent=1 // pred_check_branch
      %41 = sbr.rel (0) target = $region25
    $region24: #{my_lstm_forward.1} parent=1 // pred_region
      _
    $region25: #{my_lstm_forward.1} parent=1 // pred_fallthru
      _
    // Predicated region
    $region26: #{my_lstm_forward.1} parent=1 // pred_check
      _
    $region27: #{my_lstm_forward.1} parent=1 // pred_check_branch
      %43 = sbr.rel (0) target = $region29
    $region28: #{my_lstm_forward.1} parent=1 // pred_region
      _
    $region29: #{my_lstm_forward.1} parent=1 // pred_fallthru
      _
    // Predicated region
    $region30: #{my_lstm_forward.1} parent=1 // pred_check
      _
    $region31: #{my_lstm_forward.1} parent=1 // pred_check_branch
      %45 = sbr.rel (0) target = $region33
    $region32: #{my_lstm_forward.1} parent=1 // pred_region
      _
    $region33: #{my_lstm_forward.1} parent=1 // pred_fallthru
      _
    // Predicated region
    $region34: #{my_lstm_forward.1} parent=1 // pred_check
      _
    $region35: #{my_lstm_forward.1} parent=1 // pred_check_branch
      %47 = sbr.rel (0) target = $region37
    $region36: #{my_lstm_forward.1} parent=1 // pred_region
      %49 = dma.done [#allocation7], 4096
    $region37: #{my_lstm_forward.1} parent=1 // pred_fallthru
      _
    %p50 = scmp.eq.s32.totalorder 0, 0
    // Predicated region
    $region38: #{my_lstm_forward.1} parent=1 // pred_check
      %p51 = pneg %p50
    $region39: #{my_lstm_forward.1} parent=1 // pred_check_branch
      %53 = sbr.rel (%p51) target = $region41
    $region40: #{my_lstm_forward.1} parent=1 // pred_region
      %v54 = vld [vmem:[%s1] sm:$0xff]
      %55 = vst [vmem:[#allocation4] sm:$0xff] %v54
      %v56 = vld [vmem:[%s2] sm:$0xff]
      %57 = vst [vmem:[#allocation5] sm:$0xff] %v56
    $region41: #{my_lstm_forward.1} parent=1 // pred_fallthru
      _
    %v58 = vld [vmem:[%s0] sm:$0xf]
    %v59 = vld [vmem:[%s0 + $0x4] sm:$0xf]
    %v60 = vld [vmem:[%s0 + $0x8] sm:$0xf]
    %v61 = vld [vmem:[%s0 + $0xc] sm:$0xf]
    %v62 = vld [vmem:[%s0 + $0x10] sm:$0xf]
    %v63 = vld [vmem:[%s0 + $0x14] sm:$0xf]
    %v64 = vld [vmem:[%s0 + $0x18] sm:$0xf]
    %v65 = vld [vmem:[%s0 + $0x1c] sm:$0xf]
    %v66 = vld [vmem:[%s3] sm:$0xff]
    %v67 = vld [vmem:[%s3 + $0x8] sm:$0xff]
    %v68 = vld [vmem:[%s3 + $0x10] sm:$0xff]
    %v69 = vld [vmem:[%s3 + $0x18] sm:$0xff]
    %v70 = vld [vmem:[%s3 + $0x20] sm:$0xff]
    %v71 = vld [vmem:[%s3 + $0x28] sm:$0xff]
    %v72 = vld [vmem:[%s3 + $0x30] sm:$0xff]
    %v73 = vld [vmem:[%s3 + $0x38] sm:$0xff]
    %v74 = vld [vmem:[%s3 + $0x40] sm:$0xff]
    %v75 = vld [vmem:[%s3 + $0x48] sm:$0xff]
    %v76 = vld [vmem:[%s3 + $0x50] sm:$0xff]
    %v77 = vld [vmem:[%s3 + $0x58] sm:$0xff]
    %v78 = vld [vmem:[%s3 + $0x60] sm:$0xff]
    %v79 = vld [vmem:[%s3 + $0x68] sm:$0xff]
    %v80 = vld [vmem:[%s3 + $0x70] sm:$0xff]
    %v81 = vld [vmem:[%s3 + $0x78] sm:$0xff]
    %v82 = vld [vmem:[%s3 + $0x80] sm:$0xff]
    %v83 = vld [vmem:[%s3 + $0x88] sm:$0xff]
    %v84 = vld [vmem:[%s3 + $0x90] sm:$0xff]
    %v85 = vld [vmem:[%s3 + $0x98] sm:$0xff]
    %v86 = vld [vmem:[%s3 + $0xa0] sm:$0xff]
    %v87 = vld [vmem:[%s3 + $0xa8] sm:$0xff]
    %v88 = vld [vmem:[%s3 + $0xb0] sm:$0xff]
    %v89 = vld [vmem:[%s3 + $0xb8] sm:$0xff]
    %v90 = vld [vmem:[%s3 + $0xc0] sm:$0xff]
    %v91 = vld [vmem:[%s3 + $0xc8] sm:$0xff]
    %v92 = vld [vmem:[%s3 + $0xd0] sm:$0xff]
    %v93 = vld [vmem:[%s3 + $0xd8] sm:$0xff]
    %v94 = vld [vmem:[%s3 + $0xe0] sm:$0xff]
    %v95 = vld [vmem:[%s3 + $0xe8] sm:$0xff]
    %v96 = vld [vmem:[%s3 + $0xf0] sm:$0xff]
    %v97 = vld [vmem:[%s3 + $0xf8] sm:$0xff]
    %v98 = vld [vmem:[%s5] sm:$0xf]
    %v100 = vperm.slane %v98, 0
    %v101 = vperm.slane %v98, 1
    %v102 = vperm.slane %v98, 2
    %v103 = vperm.slane %v98, 3
    %v116 = vunpack.c.l.b16 %v58
    %v117 = vunpack.c.l.b16 %v59
    %v118 = vunpack.c.l.b16 %v60
    %v119 = vunpack.c.l.b16 %v61
    %v120 = vunpack.c.l.b16 %v62
    %v121 = vunpack.c.l.b16 %v63
    %v122 = vunpack.c.l.b16 %v64
    %v123 = vunpack.c.l.b16 %v65
    %v124 = vpack.c.b16 %v117, %v116
    %v125 = vpack.c.b16 %v119, %v118
    %v126 = vpack.c.b16 %v121, %v120
    %v127 = vpack.c.b16 %v123, %v122
    %v164 = vunpack.c.l.b16 %v66
    %v165 = vunpack.c.h.b16 %v66
    %v166 = vunpack.c.l.b16 %v67
    %v167 = vunpack.c.h.b16 %v67
    %v168 = vunpack.c.l.b16 %v68
    %v169 = vunpack.c.h.b16 %v68
    %v170 = vunpack.c.l.b16 %v69
    %v171 = vunpack.c.h.b16 %v69
    %v172 = vunpack.c.l.b16 %v70
    %v173 = vunpack.c.h.b16 %v70
    %v174 = vunpack.c.l.b16 %v71
    %v175 = vunpack.c.h.b16 %v71
    %v176 = vunpack.c.l.b16 %v72
    %v177 = vunpack.c.h.b16 %v72
    %v178 = vunpack.c.l.b16 %v73
    %v179 = vunpack.c.h.b16 %v73
    %v180 = vunpack.c.l.b16 %v74
    %v181 = vunpack.c.h.b16 %v74
    %v182 = vunpack.c.l.b16 %v75
    %v183 = vunpack.c.h.b16 %v75
    %v184 = vunpack.c.l.b16 %v76
    %v185 = vunpack.c.h.b16 %v76
    %v186 = vunpack.c.l.b16 %v77
    %v187 = vunpack.c.h.b16 %v77
    %v188 = vunpack.c.l.b16 %v78
    %v189 = vunpack.c.h.b16 %v78
    %v190 = vunpack.c.l.b16 %v79
    %v191 = vunpack.c.h.b16 %v79
    %v192 = vunpack.c.l.b16 %v80
    %v193 = vunpack.c.h.b16 %v80
    %v194 = vunpack.c.l.b16 %v81
    %v195 = vunpack.c.h.b16 %v81
    %v196 = vunpack.c.l.b16 %v82
    %v197 = vunpack.c.h.b16 %v82
    %v198 = vunpack.c.l.b16 %v83
    %v199 = vunpack.c.h.b16 %v83
    %v200 = vunpack.c.l.b16 %v84
    %v201 = vunpack.c.h.b16 %v84
    %v202 = vunpack.c.l.b16 %v85
    %v203 = vunpack.c.h.b16 %v85
    %v204 = vunpack.c.l.b16 %v86
    %v205 = vunpack.c.h.b16 %v86
    %v206 = vunpack.c.l.b16 %v87
    %v207 = vunpack.c.h.b16 %v87
    %v208 = vunpack.c.l.b16 %v88
    %v209 = vunpack.c.h.b16 %v88
    %v210 = vunpack.c.l.b16 %v89
    %v211 = vunpack.c.h.b16 %v89
    %v212 = vunpack.c.l.b16 %v90
    %v213 = vunpack.c.h.b16 %v90
    %v214 = vunpack.c.l.b16 %v91
    %v215 = vunpack.c.h.b16 %v91
    %v216 = vunpack.c.l.b16 %v92
    %v217 = vunpack.c.h.b16 %v92
    %v218 = vunpack.c.l.b16 %v93
    %v219 = vunpack.c.h.b16 %v93
    %v220 = vunpack.c.l.b16 %v94
    %v221 = vunpack.c.h.b16 %v94
    %v222 = vunpack.c.l.b16 %v95
    %v223 = vunpack.c.h.b16 %v95
    %v224 = vunpack.c.l.b16 %v96
    %v225 = vunpack.c.h.b16 %v96
    %v226 = vunpack.c.l.b16 %v97
    %v227 = vunpack.c.h.b16 %v97
    %v228 = vpack.c.b16 %v168, %v164
    %v229 = vpack.c.b16 %v169, %v165
    %v230 = vpack.c.b16 %v170, %v166
    %v231 = vpack.c.b16 %v171, %v167
    %v232 = vpack.c.b16 %v176, %v172
    %v233 = vpack.c.b16 %v177, %v173
    %v234 = vpack.c.b16 %v178, %v174
    %v235 = vpack.c.b16 %v179, %v175
    %v236 = vpack.c.b16 %v184, %v180
    %v237 = vpack.c.b16 %v185, %v181
    %v238 = vpack.c.b16 %v186, %v182
    %v239 = vpack.c.b16 %v187, %v183
    %v240 = vpack.c.b16 %v192, %v188
    %v241 = vpack.c.b16 %v193, %v189
    %v242 = vpack.c.b16 %v194, %v190
    %v243 = vpack.c.b16 %v195, %v191
    %v244 = vpack.c.b16 %v200, %v196
    %v245 = vpack.c.b16 %v201, %v197
    %v246 = vpack.c.b16 %v202, %v198
    %v247 = vpack.c.b16 %v203, %v199
    %v248 = vpack.c.b16 %v208, %v204
    %v249 = vpack.c.b16 %v209, %v205
    %v250 = vpack.c.b16 %v210, %v206
    %v251 = vpack.c.b16 %v211, %v207
    %v252 = vpack.c.b16 %v216, %v212
    %v253 = vpack.c.b16 %v217, %v213
    %v254 = vpack.c.b16 %v218, %v214
    %v255 = vpack.c.b16 %v219, %v215
    %v256 = vpack.c.b16 %v224, %v220
    %v257 = vpack.c.b16 %v225, %v221
    %v258 = vpack.c.b16 %v226, %v222
    %v259 = vpack.c.b16 %v227, %v223
    %292 = vmatpush.bf16.msra.mxu0 %v256
    %293 = vmatpush.bf16.msra.mxu0 %v252
    %294 = vmatpush.bf16.msra.mxu0 %v248
    %295 = vmatpush.bf16.msra.mxu0 %v244
    %296 = vmatpush.bf16.msra.mxu0 %v240
    %297 = vmatpush.bf16.msra.mxu0 %v236
    %298 = vmatpush.bf16.msra.mxu0 %v232
    %299 = vmatpush.bf16.msra.mxu0 %v228
    %300 = vmatmul.bf16.gmra.mxu0 %v124
    %v301 = vpop.f32.mrf.mxu0
    %v302 = vadd.f32 %v100, %v301
    %v303 = vpop.f32.mrf.mxu0
    %v304 = vadd.f32 %v100, %v303
    %305 = vmatmul.bf16.gmra.mxu0 %v125
    %v306 = vpop.f32.mrf.mxu0
    %v307 = vadd.f32 %v100, %v306
    %v308 = vpop.f32.mrf.mxu0
    %v309 = vadd.f32 %v100, %v308
    %310 = vmatmul.bf16.gmra.mxu0 %v126
    %v311 = vpop.f32.mrf.mxu0
    %v312 = vadd.f32 %v100, %v311
    %v313 = vpop.f32.mrf.mxu0
    %v314 = vadd.f32 %v100, %v313
    %315 = vmatmul.bf16.gmra.mxu0 %v127
    %v316 = vpop.f32.mrf.mxu0
    %v317 = vadd.f32 %v100, %v316
    %v318 = vpop.f32.mrf.mxu0
    %v319 = vadd.f32 %v100, %v318
    %320 = vdwg.mxu0
    %321 = vmatpush.bf16.msra.mxu0 %v257
    %322 = vmatpush.bf16.msra.mxu0 %v253
    %323 = vmatpush.bf16.msra.mxu0 %v249
    %324 = vmatpush.bf16.msra.mxu0 %v245
    %325 = vmatpush.bf16.msra.mxu0 %v241
    %326 = vmatpush.bf16.msra.mxu0 %v237
    %327 = vmatpush.bf16.msra.mxu0 %v233
    %328 = vmatpush.bf16.msra.mxu0 %v229
    %329 = vmatmul.bf16.gmra.mxu0 %v124
    %v330 = vpop.f32.mrf.mxu0
    %v331 = vadd.f32 %v101, %v330
    %v332 = vpop.f32.mrf.mxu0
    %v333 = vadd.f32 %v101, %v332
    %334 = vmatmul.bf16.gmra.mxu0 %v125
    %v335 = vpop.f32.mrf.mxu0
    %v336 = vadd.f32 %v101, %v335
    %v337 = vpop.f32.mrf.mxu0
    %v338 = vadd.f32 %v101, %v337
    %339 = vmatmul.bf16.gmra.mxu0 %v126
    %v340 = vpop.f32.mrf.mxu0
    %v341 = vadd.f32 %v101, %v340
    %v342 = vpop.f32.mrf.mxu0
    %v343 = vadd.f32 %v101, %v342
    %344 = vmatmul.bf16.gmra.mxu0 %v127
    %v345 = vpop.f32.mrf.mxu0
    %v346 = vadd.f32 %v101, %v345
    %v347 = vpop.f32.mrf.mxu0
    %v348 = vadd.f32 %v101, %v347
    %349 = vdwg.mxu0
    %350 = vmatpush.bf16.msra.mxu0 %v258
    %351 = vmatpush.bf16.msra.mxu0 %v254
    %352 = vmatpush.bf16.msra.mxu0 %v250
    %353 = vmatpush.bf16.msra.mxu0 %v246
    %354 = vmatpush.bf16.msra.mxu0 %v242
    %355 = vmatpush.bf16.msra.mxu0 %v238
    %356 = vmatpush.bf16.msra.mxu0 %v234
    %357 = vmatpush.bf16.msra.mxu0 %v230
    %358 = vmatmul.bf16.gmra.mxu0 %v124
    %v359 = vpop.f32.mrf.mxu0
    %v360 = vadd.f32 %v102, %v359
    %v361 = vpop.f32.mrf.mxu0
    %v362 = vadd.f32 %v102, %v361
    %363 = vmatmul.bf16.gmra.mxu0 %v125
    %v364 = vpop.f32.mrf.mxu0
    %v365 = vadd.f32 %v102, %v364
    %v366 = vpop.f32.mrf.mxu0
    %v367 = vadd.f32 %v102, %v366
    %368 = vmatmul.bf16.gmra.mxu0 %v126
    %v369 = vpop.f32.mrf.mxu0
    %v370 = vadd.f32 %v102, %v369
    %v371 = vpop.f32.mrf.mxu0
    %v372 = vadd.f32 %v102, %v371
    %373 = vmatmul.bf16.gmra.mxu0 %v127
    %v374 = vpop.f32.mrf.mxu0
    %v375 = vadd.f32 %v102, %v374
    %v376 = vpop.f32.mrf.mxu0
    %v377 = vadd.f32 %v102, %v376
    %378 = vdwg.mxu0
    %379 = vmatpush.bf16.msra.mxu0 %v259
    %380 = vmatpush.bf16.msra.mxu0 %v255
    %381 = vmatpush.bf16.msra.mxu0 %v251
    %382 = vmatpush.bf16.msra.mxu0 %v247
    %383 = vmatpush.bf16.msra.mxu0 %v243
    %384 = vmatpush.bf16.msra.mxu0 %v239
    %385 = vmatpush.bf16.msra.mxu0 %v235
    %386 = vmatpush.bf16.msra.mxu0 %v231
    %387 = vmatmul.bf16.gmra.mxu0 %v124
    %v388 = vpop.f32.mrf.mxu0
    %v389 = vadd.f32 %v103, %v388
    %v390 = vpop.f32.mrf.mxu0
    %v391 = vadd.f32 %v103, %v390
    %392 = vmatmul.bf16.gmra.mxu0 %v125
    %v393 = vpop.f32.mrf.mxu0
    %v394 = vadd.f32 %v103, %v393
    %v395 = vpop.f32.mrf.mxu0
    %v396 = vadd.f32 %v103, %v395
    %397 = vmatmul.bf16.gmra.mxu0 %v126
    %v398 = vpop.f32.mrf.mxu0
    %v399 = vadd.f32 %v103, %v398
    %v400 = vpop.f32.mrf.mxu0
    %v401 = vadd.f32 %v103, %v400
    %402 = vmatmul.bf16.gmra.mxu0 %v127
    %v403 = vpop.f32.mrf.mxu0
    %v404 = vadd.f32 %v103, %v403
    %v405 = vpop.f32.mrf.mxu0
    %v406 = vadd.f32 %v103, %v405
    %407 = vdwg.mxu0
    %408 = vst [vmem:[#allocation2] sm:$0xff] %v302
    %409 = vst [vmem:[#allocation2 + $0x8] sm:$0xff] %v331
    %410 = vst [vmem:[#allocation2 + $0x10] sm:$0xff] %v360
    %411 = vst [vmem:[#allocation2 + $0x18] sm:$0xff] %v389
    %412 = vst [vmem:[#allocation2 + $0x20] sm:$0xff] %v304
    %413 = vst [vmem:[#allocation2 + $0x28] sm:$0xff] %v333
    %414 = vst [vmem:[#allocation2 + $0x30] sm:$0xff] %v362
    %415 = vst [vmem:[#allocation2 + $0x38] sm:$0xff] %v391
    %416 = vst [vmem:[#allocation2 + $0x40] sm:$0xff] %v307
    %417 = vst [vmem:[#allocation2 + $0x48] sm:$0xff] %v336
    %418 = vst [vmem:[#allocation2 + $0x50] sm:$0xff] %v365
    %419 = vst [vmem:[#allocation2 + $0x58] sm:$0xff] %v394
    %420 = vst [vmem:[#allocation2 + $0x60] sm:$0xff] %v309
    %421 = vst [vmem:[#allocation2 + $0x68] sm:$0xff] %v338
    %422 = vst [vmem:[#allocation2 + $0x70] sm:$0xff] %v367
    %423 = vst [vmem:[#allocation2 + $0x78] sm:$0xff] %v396
    %424 = vst [vmem:[#allocation2 + $0x80] sm:$0xff] %v312
    %425 = vst [vmem:[#allocation2 + $0x88] sm:$0xff] %v341
    %426 = vst [vmem:[#allocation2 + $0x90] sm:$0xff] %v370
    %427 = vst [vmem:[#allocation2 + $0x98] sm:$0xff] %v399
    %428 = vst [vmem:[#allocation2 + $0xa0] sm:$0xff] %v314
    %429 = vst [vmem:[#allocation2 + $0xa8] sm:$0xff] %v343
    %430 = vst [vmem:[#allocation2 + $0xb0] sm:$0xff] %v372
    %431 = vst [vmem:[#allocation2 + $0xb8] sm:$0xff] %v401
    %432 = vst [vmem:[#allocation2 + $0xc0] sm:$0xff] %v317
    %433 = vst [vmem:[#allocation2 + $0xc8] sm:$0xff] %v346
    %434 = vst [vmem:[#allocation2 + $0xd0] sm:$0xff] %v375
    %435 = vst [vmem:[#allocation2 + $0xd8] sm:$0xff] %v404
    %436 = vst [vmem:[#allocation2 + $0xe0] sm:$0xff] %v319
    %437 = vst [vmem:[#allocation2 + $0xe8] sm:$0xff] %v348
    %438 = vst [vmem:[#allocation2 + $0xf0] sm:$0xff] %v377
    %439 = vst [vmem:[#allocation2 + $0xf8] sm:$0xff] %v406
    %v440 = vld [vmem:[#allocation4] sm:$0xff]
    %v441 = vld [vmem:[#allocation5] sm:$0xff]
    %v442 = vld [vmem:[#allocation6] sm:$0xff]
    %v443 = vld [vmem:[#allocation6 + $0x8] sm:$0xff]
    %v444 = vld [vmem:[#allocation6 + $0x10] sm:$0xff]
    %v445 = vld [vmem:[#allocation6 + $0x18] sm:$0xff]
    %v446 = vld [vmem:[#allocation6 + $0x20] sm:$0xff]
    %v447 = vld [vmem:[#allocation6 + $0x28] sm:$0xff]
    %v448 = vld [vmem:[#allocation6 + $0x30] sm:$0xff]
    %v449 = vld [vmem:[#allocation6 + $0x38] sm:$0xff]
    %v450 = vld [vmem:[#allocation6 + $0x40] sm:$0xff]
    %v451 = vld [vmem:[#allocation6 + $0x48] sm:$0xff]
    %v452 = vld [vmem:[#allocation6 + $0x50] sm:$0xff]
    %v453 = vld [vmem:[#allocation6 + $0x58] sm:$0xff]
    %v454 = vld [vmem:[#allocation6 + $0x60] sm:$0xff]
    %v455 = vld [vmem:[#allocation6 + $0x68] sm:$0xff]
    %v456 = vld [vmem:[#allocation6 + $0x70] sm:$0xff]
    %v457 = vld [vmem:[#allocation6 + $0x78] sm:$0xff]
    %v458 = vld [vmem:[#allocation6 + $0x80] sm:$0xff]
    %v459 = vld [vmem:[#allocation6 + $0x88] sm:$0xff]
    %v460 = vld [vmem:[#allocation6 + $0x90] sm:$0xff]
    %v461 = vld [vmem:[#allocation6 + $0x98] sm:$0xff]
    %v462 = vld [vmem:[#allocation6 + $0xa0] sm:$0xff]
    %v463 = vld [vmem:[#allocation6 + $0xa8] sm:$0xff]
    %v464 = vld [vmem:[#allocation6 + $0xb0] sm:$0xff]
    %v465 = vld [vmem:[#allocation6 + $0xb8] sm:$0xff]
    %v466 = vld [vmem:[#allocation6 + $0xc0] sm:$0xff]
    %v467 = vld [vmem:[#allocation6 + $0xc8] sm:$0xff]
    %v468 = vld [vmem:[#allocation6 + $0xd0] sm:$0xff]
    %v469 = vld [vmem:[#allocation6 + $0xd8] sm:$0xff]
    %v470 = vld [vmem:[#allocation6 + $0xe0] sm:$0xff]
    %v471 = vld [vmem:[#allocation6 + $0xe8] sm:$0xff]
    %v472 = vld [vmem:[#allocation6 + $0xf0] sm:$0xff]
    %v473 = vld [vmem:[#allocation6 + $0xf8] sm:$0xff]
    %v474 = vld [vmem:[#allocation2] sm:$0xff]
    %v475 = vld [vmem:[#allocation2 + $0x8] sm:$0xff]
    %v476 = vld [vmem:[#allocation2 + $0x10] sm:$0xff]
    %v477 = vld [vmem:[#allocation2 + $0x18] sm:$0xff]
    %v478 = vpack.c.bf16 %v440, %v440
    %v511 = vunpack.c.l.b16 %v442
    %v512 = vunpack.c.h.b16 %v442
    %v513 = vunpack.c.l.b16 %v443
    %v514 = vunpack.c.h.b16 %v443
    %v515 = vunpack.c.l.b16 %v444
    %v516 = vunpack.c.h.b16 %v444
    %v517 = vunpack.c.l.b16 %v445
    %v518 = vunpack.c.h.b16 %v445
    %v519 = vunpack.c.l.b16 %v446
    %v520 = vunpack.c.h.b16 %v446
    %v521 = vunpack.c.l.b16 %v447
    %v522 = vunpack.c.h.b16 %v447
    %v523 = vunpack.c.l.b16 %v448
    %v524 = vunpack.c.h.b16 %v448
    %v525 = vunpack.c.l.b16 %v449
    %v526 = vunpack.c.h.b16 %v449
    %v527 = vunpack.c.l.b16 %v450
    %v528 = vunpack.c.h.b16 %v450
    %v529 = vunpack.c.l.b16 %v451
    %v530 = vunpack.c.h.b16 %v451
    %v531 = vunpack.c.l.b16 %v452
    %v532 = vunpack.c.h.b16 %v452
    %v533 = vunpack.c.l.b16 %v453
    %v534 = vunpack.c.h.b16 %v453
    %v535 = vunpack.c.l.b16 %v454
    %v536 = vunpack.c.h.b16 %v454
    %v537 = vunpack.c.l.b16 %v455
    %v538 = vunpack.c.h.b16 %v455
    %v539 = vunpack.c.l.b16 %v456
    %v540 = vunpack.c.h.b16 %v456
    %v541 = vunpack.c.l.b16 %v457
    %v542 = vunpack.c.h.b16 %v457
    %v543 = vunpack.c.l.b16 %v458
    %v544 = vunpack.c.h.b16 %v458
    %v545 = vunpack.c.l.b16 %v459
    %v546 = vunpack.c.h.b16 %v459
    %v547 = vunpack.c.l.b16 %v460
    %v548 = vunpack.c.h.b16 %v460
    %v549 = vunpack.c.l.b16 %v461
    %v550 = vunpack.c.h.b16 %v461
    %v551 = vunpack.c.l.b16 %v462
    %v552 = vunpack.c.h.b16 %v462
    %v553 = vunpack.c.l.b16 %v463
    %v554 = vunpack.c.h.b16 %v463
    %v555 = vunpack.c.l.b16 %v464
    %v556 = vunpack.c.h.b16 %v464
    %v557 = vunpack.c.l.b16 %v465
    %v558 = vunpack.c.h.b16 %v465
    %v559 = vunpack.c.l.b16 %v466
    %v560 = vunpack.c.h.b16 %v466
    %v561 = vunpack.c.l.b16 %v467
    %v562 = vunpack.c.h.b16 %v467
    %v563 = vunpack.c.l.b16 %v468
    %v564 = vunpack.c.h.b16 %v468
    %v565 = vunpack.c.l.b16 %v469
    %v566 = vunpack.c.h.b16 %v469
    %v567 = vunpack.c.l.b16 %v470
    %v568 = vunpack.c.h.b16 %v470
    %v569 = vunpack.c.l.b16 %v471
    %v570 = vunpack.c.h.b16 %v471
    %v571 = vunpack.c.l.b16 %v472
    %v572 = vunpack.c.h.b16 %v472
    %v573 = vunpack.c.l.b16 %v473
    %v574 = vunpack.c.h.b16 %v473
    %v575 = vpack.c.b16 %v515, %v511
    %v576 = vpack.c.b16 %v516, %v512
    %v577 = vpack.c.b16 %v517, %v513
    %v578 = vpack.c.b16 %v518, %v514
    %v579 = vpack.c.b16 %v523, %v519
    %v580 = vpack.c.b16 %v524, %v520
    %v581 = vpack.c.b16 %v525, %v521
    %v582 = vpack.c.b16 %v526, %v522
    %v583 = vpack.c.b16 %v531, %v527
    %v584 = vpack.c.b16 %v532, %v528
    %v585 = vpack.c.b16 %v533, %v529
    %v586 = vpack.c.b16 %v534, %v530
    %v587 = vpack.c.b16 %v539, %v535
    %v588 = vpack.c.b16 %v540, %v536
    %v589 = vpack.c.b16 %v541, %v537
    %v590 = vpack.c.b16 %v542, %v538
    %v591 = vpack.c.b16 %v547, %v543
    %v592 = vpack.c.b16 %v548, %v544
    %v593 = vpack.c.b16 %v549, %v545
    %v594 = vpack.c.b16 %v550, %v546
    %v595 = vpack.c.b16 %v555, %v551
    %v596 = vpack.c.b16 %v556, %v552
    %v597 = vpack.c.b16 %v557, %v553
    %v598 = vpack.c.b16 %v558, %v554
    %v599 = vpack.c.b16 %v563, %v559
    %v600 = vpack.c.b16 %v564, %v560
    %v601 = vpack.c.b16 %v565, %v561
    %v602 = vpack.c.b16 %v566, %v562
    %v603 = vpack.c.b16 %v571, %v567
    %v604 = vpack.c.b16 %v572, %v568
    %v605 = vpack.c.b16 %v573, %v569
    %v606 = vpack.c.b16 %v574, %v570
    %639 = vmatpush.bf16.msra.mxu0 %v603
    %640 = vmatpush.bf16.msra.mxu0 %v599
    %641 = vmatpush.bf16.msra.mxu0 %v595
    %642 = vmatpush.bf16.msra.mxu0 %v591
    %643 = vmatpush.bf16.msra.mxu0 %v587
    %644 = vmatpush.bf16.msra.mxu0 %v583
    %645 = vmatpush.bf16.msra.mxu0 %v579
    %646 = vmatpush.bf16.msra.mxu0 %v575
    %647 = vmatmul.bf16.gmra.mxu0 %v478
    %v648 = vpop.f32.mrf.mxu0
    %v649 = vadd.f32 0.0, %v648
    %v650 = vpop.f32.mrf.mxu0
    %651 = vdwg.mxu0
    %652 = vmatpush.bf16.msra.mxu0 %v604
    %653 = vmatpush.bf16.msra.mxu0 %v600
    %654 = vmatpush.bf16.msra.mxu0 %v596
    %655 = vmatpush.bf16.msra.mxu0 %v592
    %656 = vmatpush.bf16.msra.mxu0 %v588
    %657 = vmatpush.bf16.msra.mxu0 %v584
    %658 = vmatpush.bf16.msra.mxu0 %v580
    %659 = vmatpush.bf16.msra.mxu0 %v576
    %660 = vmatmul.bf16.gmra.mxu0 %v478
    %v661 = vpop.f32.mrf.mxu0
    %v662 = vadd.f32 0.0, %v661
    %v663 = vpop.f32.mrf.mxu0
    %664 = vdwg.mxu0
    %665 = vmatpush.bf16.msra.mxu0 %v605
    %666 = vmatpush.bf16.msra.mxu0 %v601
    %667 = vmatpush.bf16.msra.mxu0 %v597
    %668 = vmatpush.bf16.msra.mxu0 %v593
    %669 = vmatpush.bf16.msra.mxu0 %v589
    %670 = vmatpush.bf16.msra.mxu0 %v585
    %671 = vmatpush.bf16.msra.mxu0 %v581
    %672 = vmatpush.bf16.msra.mxu0 %v577
    %673 = vmatmul.bf16.gmra.mxu0 %v478
    %v674 = vpop.f32.mrf.mxu0
    %v675 = vadd.f32 0.0, %v674
    %v676 = vpop.f32.mrf.mxu0
    %677 = vdwg.mxu0
    %678 = vmatpush.bf16.msra.mxu0 %v606
    %679 = vmatpush.bf16.msra.mxu0 %v602
    %680 = vmatpush.bf16.msra.mxu0 %v598
    %681 = vmatpush.bf16.msra.mxu0 %v594
    %682 = vmatpush.bf16.msra.mxu0 %v590
    %683 = vmatpush.bf16.msra.mxu0 %v586
    %684 = vmatpush.bf16.msra.mxu0 %v582
    %685 = vmatpush.bf16.msra.mxu0 %v578
    %686 = vmatmul.bf16.gmra.mxu0 %v478
    %v687 = vpop.f32.mrf.mxu0
    %v688 = vadd.f32 0.0, %v687
    %v689 = vpop.f32.mrf.mxu0
    %690 = vdwg.mxu0
    %v691 = vadd.f32 %v474, %v649
    %v692 = vadd.f32 %v475, %v662
    %v693 = vadd.f32 %v476, %v675
    %v694 = vadd.f32 %v477, %v688
    %v695 = vxor.u32 %v691, 2147483648
    %v696 = vmul.f32 %v695, 1.442695
    %v697 = vpow.pop %v696
    %v698 = vadd.f32 %v697, 1.0
    %v699 = vrcp.pop %v698
    %v700 = vmul.f32 %v698, %v699
    %v701 = vsub.f32 1.0, %v700
    %v702 = vmul.f32 %v699, %v701
    %v703 = vadd.f32 %v699, %v702
    %vm704 = vweird.f32 %v698
    %vm705 = vweird.f32 %v699
    %vm706 = vmor %vm704, %vm705
    %v707 = vsel %vm706, %v699, %v703
    %v708 = vand.u32 2147483647, %v698
    %vm709 = vcmp.eq.f32.partialorder %v708, 8.507059e+37
    %v710 = vand.u32 %v698, 2147483648
    %v711 = vor.u32 1.1754944e-38, %v710
    %v712 = vsel %vm709, %v711, %v707
    %v713 = vmul.f32 1.0, %v712
    %v714 = vxor.u32 %v692, 2147483648
    %v715 = vmul.f32 %v714, 1.442695
    %v716 = vpow.pop %v715
    %v717 = vadd.f32 %v716, 1.0
    %v718 = vrcp.pop %v717
    %v719 = vmul.f32 %v717, %v718
    %v720 = vsub.f32 1.0, %v719
    %v721 = vmul.f32 %v718, %v720
    %v722 = vadd.f32 %v718, %v721
    %vm723 = vweird.f32 %v717
    %vm724 = vweird.f32 %v718
    %vm725 = vmor %vm723, %vm724
    %v726 = vsel %vm725, %v718, %v722
    %v727 = vand.u32 2147483647, %v717
    %vm728 = vcmp.eq.f32.partialorder %v727, 8.507059e+37
    %v729 = vand.u32 %v717, 2147483648
    %v730 = vor.u32 1.1754944e-38, %v729
    %v731 = vsel %vm728, %v730, %v726
    %v732 = vmul.f32 1.0, %v731
    %v733 = vtanh.pop %v693
    %v734 = vxor.u32 %v694, 2147483648
    %v735 = vmul.f32 %v734, 1.442695
    %v736 = vpow.pop %v735
    %v737 = vadd.f32 %v736, 1.0
    %v738 = vrcp.pop %v737
    %v739 = vmul.f32 %v737, %v738
    %v740 = vsub.f32 1.0, %v739
    %v741 = vmul.f32 %v738, %v740
    %v742 = vadd.f32 %v738, %v741
    %vm743 = vweird.f32 %v737
    %vm744 = vweird.f32 %v738
    %vm745 = vmor %vm743, %vm744
    %v746 = vsel %vm745, %v738, %v742
    %v747 = vand.u32 2147483647, %v737
    %vm748 = vcmp.eq.f32.partialorder %v747, 8.507059e+37
    %v749 = vand.u32 %v737, 2147483648
    %v750 = vor.u32 1.1754944e-38, %v749
    %v751 = vsel %vm748, %v750, %v746
    %v752 = vmul.f32 1.0, %v751
    %v753 = vmul.f32 %v732, %v441
    %v754 = vmul.f32 %v713, %v733
    %v755 = vadd.f32 %v753, %v754
    %v756 = vtanh.pop %v755
    %v757 = vmul.f32 %v752, %v756
    %758 = vst [vmem:[#allocation3] sm:$0xff] %v757
    %v759 = vld [vmem:[#allocation2 + $0x20] sm:$0xff]
    %v760 = vld [vmem:[#allocation2 + $0x28] sm:$0xff]
    %v761 = vld [vmem:[#allocation2 + $0x30] sm:$0xff]
    %v762 = vld [vmem:[#allocation2 + $0x38] sm:$0xff]
    %v763 = vpack.c.bf16 %v757, %v757
    %764 = vmatpush.bf16.msra.mxu0 %v603
    %765 = vmatpush.bf16.msra.mxu0 %v599
    %766 = vmatpush.bf16.msra.mxu0 %v595
    %767 = vmatpush.bf16.msra.mxu0 %v591
    %768 = vmatpush.bf16.msra.mxu0 %v587
    %769 = vmatpush.bf16.msra.mxu0 %v583
    %770 = vmatpush.bf16.msra.mxu0 %v579
    %771 = vmatpush.bf16.msra.mxu0 %v575
    %772 = vmatmul.bf16.gmra.mxu0 %v763
    %v773 = vpop.f32.mrf.mxu0
    %v774 = vadd.f32 0.0, %v773
    %v775 = vpop.f32.mrf.mxu0
    %776 = vdwg.mxu0
    %777 = vmatpush.bf16.msra.mxu0 %v604
    %778 = vmatpush.bf16.msra.mxu0 %v600
    %779 = vmatpush.bf16.msra.mxu0 %v596
    %780 = vmatpush.bf16.msra.mxu0 %v592
    %781 = vmatpush.bf16.msra.mxu0 %v588
    %782 = vmatpush.bf16.msra.mxu0 %v584
    %783 = vmatpush.bf16.msra.mxu0 %v580
    %784 = vmatpush.bf16.msra.mxu0 %v576
    %785 = vmatmul.bf16.gmra.mxu0 %v763
    %v786 = vpop.f32.mrf.mxu0
    %v787 = vadd.f32 0.0, %v786
    %v788 = vpop.f32.mrf.mxu0
    %789 = vdwg.mxu0
    %790 = vmatpush.bf16.msra.mxu0 %v605
    %791 = vmatpush.bf16.msra.mxu0 %v601
    %792 = vmatpush.bf16.msra.mxu0 %v597
    %793 = vmatpush.bf16.msra.mxu0 %v593
    %794 = vmatpush.bf16.msra.mxu0 %v589
    %795 = vmatpush.bf16.msra.mxu0 %v585
    %796 = vmatpush.bf16.msra.mxu0 %v581
    %797 = vmatpush.bf16.msra.mxu0 %v577
    %798 = vmatmul.bf16.gmra.mxu0 %v763
    %v799 = vpop.f32.mrf.mxu0
    %v800 = vadd.f32 0.0, %v799
    %v801 = vpop.f32.mrf.mxu0
    %802 = vdwg.mxu0
    %803 = vmatpush.bf16.msra.mxu0 %v606
    %804 = vmatpush.bf16.msra.mxu0 %v602
    %805 = vmatpush.bf16.msra.mxu0 %v598
    %806 = vmatpush.bf16.msra.mxu0 %v594
    %807 = vmatpush.bf16.msra.mxu0 %v590
    %808 = vmatpush.bf16.msra.mxu0 %v586
    %809 = vmatpush.bf16.msra.mxu0 %v582
    %810 = vmatpush.bf16.msra.mxu0 %v578
    %811 = vmatmul.bf16.gmra.mxu0 %v763
    %v812 = vpop.f32.mrf.mxu0
    %v813 = vadd.f32 0.0, %v812
    %v814 = vpop.f32.mrf.mxu0
    %815 = vdwg.mxu0
    %v816 = vadd.f32 %v759, %v774
    %v817 = vadd.f32 %v760, %v787
    %v818 = vadd.f32 %v761, %v800
    %v819 = vadd.f32 %v762, %v813
    %v820 = vxor.u32 %v816, 2147483648
    %v821 = vmul.f32 %v820, 1.442695
    %v822 = vpow.pop %v821
    %v823 = vadd.f32 %v822, 1.0
    %v824 = vrcp.pop %v823
    %v825 = vmul.f32 %v823, %v824
    %v826 = vsub.f32 1.0, %v825
    %v827 = vmul.f32 %v824, %v826
    %v828 = vadd.f32 %v824, %v827
    %vm829 = vweird.f32 %v823
    %vm830 = vweird.f32 %v824
    %vm831 = vmor %vm829, %vm830
    %v832 = vsel %vm831, %v824, %v828
    %v833 = vand.u32 2147483647, %v823
    %vm834 = vcmp.eq.f32.partialorder %v833, 8.507059e+37
    %v835 = vand.u32 %v823, 2147483648
    %v836 = vor.u32 1.1754944e-38, %v835
    %v837 = vsel %vm834, %v836, %v832
    %v838 = vmul.f32 1.0, %v837
    %v839 = vxor.u32 %v817, 2147483648
    %v840 = vmul.f32 %v839, 1.442695
    %v841 = vpow.pop %v840
    %v842 = vadd.f32 %v841, 1.0
    %v843 = vrcp.pop %v842
    %v844 = vmul.f32 %v842, %v843
    %v845 = vsub.f32 1.0, %v844
    %v846 = vmul.f32 %v843, %v845
    %v847 = vadd.f32 %v843, %v846
    %vm848 = vweird.f32 %v842
    %vm849 = vweird.f32 %v843
    %vm850 = vmor %vm848, %vm849
    %v851 = vsel %vm850, %v843, %v847
    %v852 = vand.u32 2147483647, %v842
    %vm853 = vcmp.eq.f32.partialorder %v852, 8.507059e+37
    %v854 = vand.u32 %v842, 2147483648
    %v855 = vor.u32 1.1754944e-38, %v854
    %v856 = vsel %vm853, %v855, %v851
    %v857 = vmul.f32 1.0, %v856
    %v858 = vtanh.pop %v818
    %v859 = vxor.u32 %v819, 2147483648
    %v860 = vmul.f32 %v859, 1.442695
    %v861 = vpow.pop %v860
    %v862 = vadd.f32 %v861, 1.0
    %v863 = vrcp.pop %v862
    %v864 = vmul.f32 %v862, %v863
    %v865 = vsub.f32 1.0, %v864
    %v866 = vmul.f32 %v863, %v865
    %v867 = vadd.f32 %v863, %v866
    %vm868 = vweird.f32 %v862
    %vm869 = vweird.f32 %v863
    %vm870 = vmor %vm868, %vm869
    %v871 = vsel %vm870, %v863, %v867
    %v872 = vand.u32 2147483647, %v862
    %vm873 = vcmp.eq.f32.partialorder %v872, 8.507059e+37
    %v874 = vand.u32 %v862, 2147483648
    %v875 = vor.u32 1.1754944e-38, %v874
    %v876 = vsel %vm873, %v875, %v871
    %v877 = vmul.f32 1.0, %v876
    %v878 = vmul.f32 %v857, %v755
    %v879 = vmul.f32 %v838, %v858
    %v880 = vadd.f32 %v878, %v879
    %v881 = vtanh.pop %v880
    %v882 = vmul.f32 %v877, %v881
    %883 = vst [vmem:[#allocation3 + $0x8] sm:$0xff] %v882
    %v884 = vld [vmem:[#allocation2 + $0x40] sm:$0xff]
    %v885 = vld [vmem:[#allocation2 + $0x48] sm:$0xff]
    %v886 = vld [vmem:[#allocation2 + $0x50] sm:$0xff]
    %v887 = vld [vmem:[#allocation2 + $0x58] sm:$0xff]
    %v888 = vpack.c.bf16 %v882, %v882
    %889 = vmatpush.bf16.msra.mxu0 %v603
    %890 = vmatpush.bf16.msra.mxu0 %v599
    %891 = vmatpush.bf16.msra.mxu0 %v595
    %892 = vmatpush.bf16.msra.mxu0 %v591
    %893 = vmatpush.bf16.msra.mxu0 %v587
    %894 = vmatpush.bf16.msra.mxu0 %v583
    %895 = vmatpush.bf16.msra.mxu0 %v579
    %896 = vmatpush.bf16.msra.mxu0 %v575
    %897 = vmatmul.bf16.gmra.mxu0 %v888
    %v898 = vpop.f32.mrf.mxu0
    %v899 = vadd.f32 0.0, %v898
    %v900 = vpop.f32.mrf.mxu0
    %901 = vdwg.mxu0
    %902 = vmatpush.bf16.msra.mxu0 %v604
    %903 = vmatpush.bf16.msra.mxu0 %v600
    %904 = vmatpush.bf16.msra.mxu0 %v596
    %905 = vmatpush.bf16.msra.mxu0 %v592
    %906 = vmatpush.bf16.msra.mxu0 %v588
    %907 = vmatpush.bf16.msra.mxu0 %v584
    %908 = vmatpush.bf16.msra.mxu0 %v580
    %909 = vmatpush.bf16.msra.mxu0 %v576
    %910 = vmatmul.bf16.gmra.mxu0 %v888
    %v911 = vpop.f32.mrf.mxu0
    %v912 = vadd.f32 0.0, %v911
    %v913 = vpop.f32.mrf.mxu0
    %914 = vdwg.mxu0
    %915 = vmatpush.bf16.msra.mxu0 %v605
    %916 = vmatpush.bf16.msra.mxu0 %v601
    %917 = vmatpush.bf16.msra.mxu0 %v597
    %918 = vmatpush.bf16.msra.mxu0 %v593
    %919 = vmatpush.bf16.msra.mxu0 %v589
    %920 = vmatpush.bf16.msra.mxu0 %v585
    %921 = vmatpush.bf16.msra.mxu0 %v581
    %922 = vmatpush.bf16.msra.mxu0 %v577
    %923 = vmatmul.bf16.gmra.mxu0 %v888
    %v924 = vpop.f32.mrf.mxu0
    %v925 = vadd.f32 0.0, %v924
    %v926 = vpop.f32.mrf.mxu0
    %927 = vdwg.mxu0
    %928 = vmatpush.bf16.msra.mxu0 %v606
    %929 = vmatpush.bf16.msra.mxu0 %v602
    %930 = vmatpush.bf16.msra.mxu0 %v598
    %931 = vmatpush.bf16.msra.mxu0 %v594
    %932 = vmatpush.bf16.msra.mxu0 %v590
    %933 = vmatpush.bf16.msra.mxu0 %v586
    %934 = vmatpush.bf16.msra.mxu0 %v582
    %935 = vmatpush.bf16.msra.mxu0 %v578
    %936 = vmatmul.bf16.gmra.mxu0 %v888
    %v937 = vpop.f32.mrf.mxu0
    %v938 = vadd.f32 0.0, %v937
    %v939 = vpop.f32.mrf.mxu0
    %940 = vdwg.mxu0
    %v941 = vadd.f32 %v884, %v899
    %v942 = vadd.f32 %v885, %v912
    %v943 = vadd.f32 %v886, %v925
    %v944 = vadd.f32 %v887, %v938
    %v945 = vxor.u32 %v941, 2147483648
    %v946 = vmul.f32 %v945, 1.442695
    %v947 = vpow.pop %v946
    %v948 = vadd.f32 %v947, 1.0
    %v949 = vrcp.pop %v948
    %v950 = vmul.f32 %v948, %v949
    %v951 = vsub.f32 1.0, %v950
    %v952 = vmul.f32 %v949, %v951
    %v953 = vadd.f32 %v949, %v952
    %vm954 = vweird.f32 %v948
    %vm955 = vweird.f32 %v949
    %vm956 = vmor %vm954, %vm955
    %v957 = vsel %vm956, %v949, %v953
    %v958 = vand.u32 2147483647, %v948
    %vm959 = vcmp.eq.f32.partialorder %v958, 8.507059e+37
    %v960 = vand.u32 %v948, 2147483648
    %v961 = vor.u32 1.1754944e-38, %v960
    %v962 = vsel %vm959, %v961, %v957
    %v963 = vmul.f32 1.0, %v962
    %v964 = vxor.u32 %v942, 2147483648
    %v965 = vmul.f32 %v964, 1.442695
    %v966 = vpow.pop %v965
    %v967 = vadd.f32 %v966, 1.0
    %v968 = vrcp.pop %v967
    %v969 = vmul.f32 %v967, %v968
    %v970 = vsub.f32 1.0, %v969
    %v971 = vmul.f32 %v968, %v970
    %v972 = vadd.f32 %v968, %v971
    %vm973 = vweird.f32 %v967
    %vm974 = vweird.f32 %v968
    %vm975 = vmor %vm973, %vm974
    %v976 = vsel %vm975, %v968, %v972
    %v977 = vand.u32 2147483647, %v967
    %vm978 = vcmp.eq.f32.partialorder %v977, 8.507059e+37
    %v979 = vand.u32 %v967, 2147483648
    %v980 = vor.u32 1.1754944e-38, %v979
    %v981 = vsel %vm978, %v980, %v976
    %v982 = vmul.f32 1.0, %v981
    %v983 = vtanh.pop %v943
    %v984 = vxor.u32 %v944, 2147483648
    %v985 = vmul.f32 %v984, 1.442695
    %v986 = vpow.pop %v985
    %v987 = vadd.f32 %v986, 1.0
    %v988 = vrcp.pop %v987
    %v989 = vmul.f32 %v987, %v988
    %v990 = vsub.f32 1.0, %v989
    %v991 = vmul.f32 %v988, %v990
    %v992 = vadd.f32 %v988, %v991
    %vm993 = vweird.f32 %v987
    %vm994 = vweird.f32 %v988
    %vm995 = vmor %vm993, %vm994
    %v996 = vsel %vm995, %v988, %v992
    %v997 = vand.u32 2147483647, %v987
    %vm998 = vcmp.eq.f32.partialorder %v997, 8.507059e+37
    %v999 = vand.u32 %v987, 2147483648
    %v1000 = vor.u32 1.1754944e-38, %v999
    %v1001 = vsel %vm998, %v1000, %v996
    %v1002 = vmul.f32 1.0, %v1001
    %v1003 = vmul.f32 %v982, %v880
    %v1004 = vmul.f32 %v963, %v983
    %v1005 = vadd.f32 %v1003, %v1004
    %v1006 = vtanh.pop %v1005
    %v1007 = vmul.f32 %v1002, %v1006
    %1008 = vst [vmem:[#allocation3 + $0x10] sm:$0xff] %v1007
    %v1009 = vld [vmem:[#allocation2 + $0x60] sm:$0xff]
    %v1010 = vld [vmem:[#allocation2 + $0x68] sm:$0xff]
    %v1011 = vld [vmem:[#allocation2 + $0x70] sm:$0xff]
    %v1012 = vld [vmem:[#allocation2 + $0x78] sm:$0xff]
    %v1013 = vpack.c.bf16 %v1007, %v1007
    %1014 = vmatpush.bf16.msra.mxu0 %v603
    %1015 = vmatpush.bf16.msra.mxu0 %v599
    %1016 = vmatpush.bf16.msra.mxu0 %v595
    %1017 = vmatpush.bf16.msra.mxu0 %v591
    %1018 = vmatpush.bf16.msra.mxu0 %v587
    %1019 = vmatpush.bf16.msra.mxu0 %v583
    %1020 = vmatpush.bf16.msra.mxu0 %v579
    %1021 = vmatpush.bf16.msra.mxu0 %v575
    %1022 = vmatmul.bf16.gmra.mxu0 %v1013
    %v1023 = vpop.f32.mrf.mxu0
    %v1024 = vadd.f32 0.0, %v1023
    %v1025 = vpop.f32.mrf.mxu0
    %1026 = vdwg.mxu0
    %1027 = vmatpush.bf16.msra.mxu0 %v604
    %1028 = vmatpush.bf16.msra.mxu0 %v600
    %1029 = vmatpush.bf16.msra.mxu0 %v596
    %1030 = vmatpush.bf16.msra.mxu0 %v592
    %1031 = vmatpush.bf16.msra.mxu0 %v588
    %1032 = vmatpush.bf16.msra.mxu0 %v584
    %1033 = vmatpush.bf16.msra.mxu0 %v580
    %1034 = vmatpush.bf16.msra.mxu0 %v576
    %1035 = vmatmul.bf16.gmra.mxu0 %v1013
    %v1036 = vpop.f32.mrf.mxu0
    %v1037 = vadd.f32 0.0, %v1036
    %v1038 = vpop.f32.mrf.mxu0
    %1039 = vdwg.mxu0
    %1040 = vmatpush.bf16.msra.mxu0 %v605
    %1041 = vmatpush.bf16.msra.mxu0 %v601
    %1042 = vmatpush.bf16.msra.mxu0 %v597
    %1043 = vmatpush.bf16.msra.mxu0 %v593
    %1044 = vmatpush.bf16.msra.mxu0 %v589
    %1045 = vmatpush.bf16.msra.mxu0 %v585
    %1046 = vmatpush.bf16.msra.mxu0 %v581
    %1047 = vmatpush.bf16.msra.mxu0 %v577
    %1048 = vmatmul.bf16.gmra.mxu0 %v1013
    %v1049 = vpop.f32.mrf.mxu0
    %v1050 = vadd.f32 0.0, %v1049
    %v1051 = vpop.f32.mrf.mxu0
    %1052 = vdwg.mxu0
    %1053 = vmatpush.bf16.msra.mxu0 %v606
    %1054 = vmatpush.bf16.msra.mxu0 %v602
    %1055 = vmatpush.bf16.msra.mxu0 %v598
    %1056 = vmatpush.bf16.msra.mxu0 %v594
    %1057 = vmatpush.bf16.msra.mxu0 %v590
    %1058 = vmatpush.bf16.msra.mxu0 %v586
    %1059 = vmatpush.bf16.msra.mxu0 %v582
    %1060 = vmatpush.bf16.msra.mxu0 %v578
    %1061 = vmatmul.bf16.gmra.mxu0 %v1013
    %v1062 = vpop.f32.mrf.mxu0
    %v1063 = vadd.f32 0.0, %v1062
    %v1064 = vpop.f32.mrf.mxu0
    %1065 = vdwg.mxu0
    %v1066 = vadd.f32 %v1009, %v1024
    %v1067 = vadd.f32 %v1010, %v1037
    %v1068 = vadd.f32 %v1011, %v1050
    %v1069 = vadd.f32 %v1012, %v1063
    %v1070 = vxor.u32 %v1066, 2147483648
    %v1071 = vmul.f32 %v1070, 1.442695
    %v1072 = vpow.pop %v1071
    %v1073 = vadd.f32 %v1072, 1.0
    %v1074 = vrcp.pop %v1073
    %v1075 = vmul.f32 %v1073, %v1074
    %v1076 = vsub.f32 1.0, %v1075
    %v1077 = vmul.f32 %v1074, %v1076
    %v1078 = vadd.f32 %v1074, %v1077
    %vm1079 = vweird.f32 %v1073
    %vm1080 = vweird.f32 %v1074
    %vm1081 = vmor %vm1079, %vm1080
    %v1082 = vsel %vm1081, %v1074, %v1078
    %v1083 = vand.u32 2147483647, %v1073
    %vm1084 = vcmp.eq.f32.partialorder %v1083, 8.507059e+37
    %v1085 = vand.u32 %v1073, 2147483648
    %v1086 = vor.u32 1.1754944e-38, %v1085
    %v1087 = vsel %vm1084, %v1086, %v1082
    %v1088 = vmul.f32 1.0, %v1087
    %v1089 = vxor.u32 %v1067, 2147483648
    %v1090 = vmul.f32 %v1089, 1.442695
    %v1091 = vpow.pop %v1090
    %v1092 = vadd.f32 %v1091, 1.0
    %v1093 = vrcp.pop %v1092
    %v1094 = vmul.f32 %v1092, %v1093
    %v1095 = vsub.f32 1.0, %v1094
    %v1096 = vmul.f32 %v1093, %v1095
    %v1097 = vadd.f32 %v1093, %v1096
    %vm1098 = vweird.f32 %v1092
    %vm1099 = vweird.f32 %v1093
    %vm1100 = vmor %vm1098, %vm1099
    %v1101 = vsel %vm1100, %v1093, %v1097
    %v1102 = vand.u32 2147483647, %v1092
    %vm1103 = vcmp.eq.f32.partialorder %v1102, 8.507059e+37
    %v1104 = vand.u32 %v1092, 2147483648
    %v1105 = vor.u32 1.1754944e-38, %v1104
    %v1106 = vsel %vm1103, %v1105, %v1101
    %v1107 = vmul.f32 1.0, %v1106
    %v1108 = vtanh.pop %v1068
    %v1109 = vxor.u32 %v1069, 2147483648
    %v1110 = vmul.f32 %v1109, 1.442695
    %v1111 = vpow.pop %v1110
    %v1112 = vadd.f32 %v1111, 1.0
    %v1113 = vrcp.pop %v1112
    %v1114 = vmul.f32 %v1112, %v1113
    %v1115 = vsub.f32 1.0, %v1114
    %v1116 = vmul.f32 %v1113, %v1115
    %v1117 = vadd.f32 %v1113, %v1116
    %vm1118 = vweird.f32 %v1112
    %vm1119 = vweird.f32 %v1113
    %vm1120 = vmor %vm1118, %vm1119
    %v1121 = vsel %vm1120, %v1113, %v1117
    %v1122 = vand.u32 2147483647, %v1112
    %vm1123 = vcmp.eq.f32.partialorder %v1122, 8.507059e+37
    %v1124 = vand.u32 %v1112, 2147483648
    %v1125 = vor.u32 1.1754944e-38, %v1124
    %v1126 = vsel %vm1123, %v1125, %v1121
    %v1127 = vmul.f32 1.0, %v1126
    %v1128 = vmul.f32 %v1107, %v1005
    %v1129 = vmul.f32 %v1088, %v1108
    %v1130 = vadd.f32 %v1128, %v1129
    %v1131 = vtanh.pop %v1130
    %v1132 = vmul.f32 %v1127, %v1131
    %1133 = vst [vmem:[#allocation3 + $0x18] sm:$0xff] %v1132
    %v1134 = vld [vmem:[#allocation2 + $0x80] sm:$0xff]
    %v1135 = vld [vmem:[#allocation2 + $0x88] sm:$0xff]
    %v1136 = vld [vmem:[#allocation2 + $0x90] sm:$0xff]
    %v1137 = vld [vmem:[#allocation2 + $0x98] sm:$0xff]
    %v1138 = vpack.c.bf16 %v1132, %v1132
    %1139 = vmatpush.bf16.msra.mxu0 %v603
    %1140 = vmatpush.bf16.msra.mxu0 %v599
    %1141 = vmatpush.bf16.msra.mxu0 %v595
    %1142 = vmatpush.bf16.msra.mxu0 %v591
    %1143 = vmatpush.bf16.msra.mxu0 %v587
    %1144 = vmatpush.bf16.msra.mxu0 %v583
    %1145 = vmatpush.bf16.msra.mxu0 %v579
    %1146 = vmatpush.bf16.msra.mxu0 %v575
    %1147 = vmatmul.bf16.gmra.mxu0 %v1138
    %v1148 = vpop.f32.mrf.mxu0
    %v1149 = vadd.f32 0.0, %v1148
    %v1150 = vpop.f32.mrf.mxu0
    %1151 = vdwg.mxu0
    %1152 = vmatpush.bf16.msra.mxu0 %v604
    %1153 = vmatpush.bf16.msra.mxu0 %v600
    %1154 = vmatpush.bf16.msra.mxu0 %v596
    %1155 = vmatpush.bf16.msra.mxu0 %v592
    %1156 = vmatpush.bf16.msra.mxu0 %v588
    %1157 = vmatpush.bf16.msra.mxu0 %v584
    %1158 = vmatpush.bf16.msra.mxu0 %v580
    %1159 = vmatpush.bf16.msra.mxu0 %v576
    %1160 = vmatmul.bf16.gmra.mxu0 %v1138
    %v1161 = vpop.f32.mrf.mxu0
    %v1162 = vadd.f32 0.0, %v1161
    %v1163 = vpop.f32.mrf.mxu0
    %1164 = vdwg.mxu0
    %1165 = vmatpush.bf16.msra.mxu0 %v605
    %1166 = vmatpush.bf16.msra.mxu0 %v601
    %1167 = vmatpush.bf16.msra.mxu0 %v597
    %1168 = vmatpush.bf16.msra.mxu0 %v593
    %1169 = vmatpush.bf16.msra.mxu0 %v589
    %1170 = vmatpush.bf16.msra.mxu0 %v585
    %1171 = vmatpush.bf16.msra.mxu0 %v581
    %1172 = vmatpush.bf16.msra.mxu0 %v577
    %1173 = vmatmul.bf16.gmra.mxu0 %v1138
    %v1174 = vpop.f32.mrf.mxu0
    %v1175 = vadd.f32 0.0, %v1174
    %v1176 = vpop.f32.mrf.mxu0
    %1177 = vdwg.mxu0
    %1178 = vmatpush.bf16.msra.mxu0 %v606
    %1179 = vmatpush.bf16.msra.mxu0 %v602
    %1180 = vmatpush.bf16.msra.mxu0 %v598
    %1181 = vmatpush.bf16.msra.mxu0 %v594
    %1182 = vmatpush.bf16.msra.mxu0 %v590
    %1183 = vmatpush.bf16.msra.mxu0 %v586
    %1184 = vmatpush.bf16.msra.mxu0 %v582
    %1185 = vmatpush.bf16.msra.mxu0 %v578
    %1186 = vmatmul.bf16.gmra.mxu0 %v1138
    %v1187 = vpop.f32.mrf.mxu0
    %v1188 = vadd.f32 0.0, %v1187
    %v1189 = vpop.f32.mrf.mxu0
    %1190 = vdwg.mxu0
    %v1191 = vadd.f32 %v1134, %v1149
    %v1192 = vadd.f32 %v1135, %v1162
    %v1193 = vadd.f32 %v1136, %v1175
    %v1194 = vadd.f32 %v1137, %v1188
    %v1195 = vxor.u32 %v1191, 2147483648
    %v1196 = vmul.f32 %v1195, 1.442695
    %v1197 = vpow.pop %v1196
    %v1198 = vadd.f32 %v1197, 1.0
    %v1199 = vrcp.pop %v1198
    %v1200 = vmul.f32 %v1198, %v1199
    %v1201 = vsub.f32 1.0, %v1200
    %v1202 = vmul.f32 %v1199, %v1201
    %v1203 = vadd.f32 %v1199, %v1202
    %vm1204 = vweird.f32 %v1198
    %vm1205 = vweird.f32 %v1199
    %vm1206 = vmor %vm1204, %vm1205
    %v1207 = vsel %vm1206, %v1199, %v1203
    %v1208 = vand.u32 2147483647, %v1198
    %vm1209 = vcmp.eq.f32.partialorder %v1208, 8.507059e+37
    %v1210 = vand.u32 %v1198, 2147483648
    %v1211 = vor.u32 1.1754944e-38, %v1210
    %v1212 = vsel %vm1209, %v1211, %v1207
    %v1213 = vmul.f32 1.0, %v1212
    %v1214 = vxor.u32 %v1192, 2147483648
    %v1215 = vmul.f32 %v1214, 1.442695
    %v1216 = vpow.pop %v1215
    %v1217 = vadd.f32 %v1216, 1.0
    %v1218 = vrcp.pop %v1217
    %v1219 = vmul.f32 %v1217, %v1218
    %v1220 = vsub.f32 1.0, %v1219
    %v1221 = vmul.f32 %v1218, %v1220
    %v1222 = vadd.f32 %v1218, %v1221
    %vm1223 = vweird.f32 %v1217
    %vm1224 = vweird.f32 %v1218
    %vm1225 = vmor %vm1223, %vm1224
    %v1226 = vsel %vm1225, %v1218, %v1222
    %v1227 = vand.u32 2147483647, %v1217
    %vm1228 = vcmp.eq.f32.partialorder %v1227, 8.507059e+37
    %v1229 = vand.u32 %v1217, 2147483648
    %v1230 = vor.u32 1.1754944e-38, %v1229
    %v1231 = vsel %vm1228, %v1230, %v1226
    %v1232 = vmul.f32 1.0, %v1231
    %v1233 = vtanh.pop %v1193
    %v1234 = vxor.u32 %v1194, 2147483648
    %v1235 = vmul.f32 %v1234, 1.442695
    %v1236 = vpow.pop %v1235
    %v1237 = vadd.f32 %v1236, 1.0
    %v1238 = vrcp.pop %v1237
    %v1239 = vmul.f32 %v1237, %v1238
    %v1240 = vsub.f32 1.0, %v1239
    %v1241 = vmul.f32 %v1238, %v1240
    %v1242 = vadd.f32 %v1238, %v1241
    %vm1243 = vweird.f32 %v1237
    %vm1244 = vweird.f32 %v1238
    %vm1245 = vmor %vm1243, %vm1244
    %v1246 = vsel %vm1245, %v1238, %v1242
    %v1247 = vand.u32 2147483647, %v1237
    %vm1248 = vcmp.eq.f32.partialorder %v1247, 8.507059e+37
    %v1249 = vand.u32 %v1237, 2147483648
    %v1250 = vor.u32 1.1754944e-38, %v1249
    %v1251 = vsel %vm1248, %v1250, %v1246
    %v1252 = vmul.f32 1.0, %v1251
    %v1253 = vmul.f32 %v1232, %v1130
    %v1254 = vmul.f32 %v1213, %v1233
    %v1255 = vadd.f32 %v1253, %v1254
    %v1256 = vtanh.pop %v1255
    %v1257 = vmul.f32 %v1252, %v1256
    %1258 = vst [vmem:[#allocation3 + $0x20] sm:$0xff] %v1257
    %v1259 = vld [vmem:[#allocation2 + $0xa0] sm:$0xff]
    %v1260 = vld [vmem:[#allocation2 + $0xa8] sm:$0xff]
    %v1261 = vld [vmem:[#allocation2 + $0xb0] sm:$0xff]
    %v1262 = vld [vmem:[#allocation2 + $0xb8] sm:$0xff]
    %v1263 = vpack.c.bf16 %v1257, %v1257
    %1264 = vmatpush.bf16.msra.mxu0 %v603
    %1265 = vmatpush.bf16.msra.mxu0 %v599
    %1266 = vmatpush.bf16.msra.mxu0 %v595
    %1267 = vmatpush.bf16.msra.mxu0 %v591
    %1268 = vmatpush.bf16.msra.mxu0 %v587
    %1269 = vmatpush.bf16.msra.mxu0 %v583
    %1270 = vmatpush.bf16.msra.mxu0 %v579
    %1271 = vmatpush.bf16.msra.mxu0 %v575
    %1272 = vmatmul.bf16.gmra.mxu0 %v1263
    %v1273 = vpop.f32.mrf.mxu0
    %v1274 = vadd.f32 0.0, %v1273
    %v1275 = vpop.f32.mrf.mxu0
    %1276 = vdwg.mxu0
    %1277 = vmatpush.bf16.msra.mxu0 %v604
    %1278 = vmatpush.bf16.msra.mxu0 %v600
    %1279 = vmatpush.bf16.msra.mxu0 %v596
    %1280 = vmatpush.bf16.msra.mxu0 %v592
    %1281 = vmatpush.bf16.msra.mxu0 %v588
    %1282 = vmatpush.bf16.msra.mxu0 %v584
    %1283 = vmatpush.bf16.msra.mxu0 %v580
    %1284 = vmatpush.bf16.msra.mxu0 %v576
    %1285 = vmatmul.bf16.gmra.mxu0 %v1263
    %v1286 = vpop.f32.mrf.mxu0
    %v1287 = vadd.f32 0.0, %v1286
    %v1288 = vpop.f32.mrf.mxu0
    %1289 = vdwg.mxu0
    %1290 = vmatpush.bf16.msra.mxu0 %v605
    %1291 = vmatpush.bf16.msra.mxu0 %v601
    %1292 = vmatpush.bf16.msra.mxu0 %v597
    %1293 = vmatpush.bf16.msra.mxu0 %v593
    %1294 = vmatpush.bf16.msra.mxu0 %v589
    %1295 = vmatpush.bf16.msra.mxu0 %v585
    %1296 = vmatpush.bf16.msra.mxu0 %v581
    %1297 = vmatpush.bf16.msra.mxu0 %v577
    %1298 = vmatmul.bf16.gmra.mxu0 %v1263
    %v1299 = vpop.f32.mrf.mxu0
    %v1300 = vadd.f32 0.0, %v1299
    %v1301 = vpop.f32.mrf.mxu0
    %1302 = vdwg.mxu0
    %1303 = vmatpush.bf16.msra.mxu0 %v606
    %1304 = vmatpush.bf16.msra.mxu0 %v602
    %1305 = vmatpush.bf16.msra.mxu0 %v598
    %1306 = vmatpush.bf16.msra.mxu0 %v594
    %1307 = vmatpush.bf16.msra.mxu0 %v590
    %1308 = vmatpush.bf16.msra.mxu0 %v586
    %1309 = vmatpush.bf16.msra.mxu0 %v582
    %1310 = vmatpush.bf16.msra.mxu0 %v578
    %1311 = vmatmul.bf16.gmra.mxu0 %v1263
    %v1312 = vpop.f32.mrf.mxu0
    %v1313 = vadd.f32 0.0, %v1312
    %v1314 = vpop.f32.mrf.mxu0
    %1315 = vdwg.mxu0
    %v1316 = vadd.f32 %v1259, %v1274
    %v1317 = vadd.f32 %v1260, %v1287
    %v1318 = vadd.f32 %v1261, %v1300
    %v1319 = vadd.f32 %v1262, %v1313
    %v1320 = vxor.u32 %v1316, 2147483648
    %v1321 = vmul.f32 %v1320, 1.442695
    %v1322 = vpow.pop %v1321
    %v1323 = vadd.f32 %v1322, 1.0
    %v1324 = vrcp.pop %v1323
    %v1325 = vmul.f32 %v1323, %v1324
    %v1326 = vsub.f32 1.0, %v1325
    %v1327 = vmul.f32 %v1324, %v1326
    %v1328 = vadd.f32 %v1324, %v1327
    %vm1329 = vweird.f32 %v1323
    %vm1330 = vweird.f32 %v1324
    %vm1331 = vmor %vm1329, %vm1330
    %v1332 = vsel %vm1331, %v1324, %v1328
    %v1333 = vand.u32 2147483647, %v1323
    %vm1334 = vcmp.eq.f32.partialorder %v1333, 8.507059e+37
    %v1335 = vand.u32 %v1323, 2147483648
    %v1336 = vor.u32 1.1754944e-38, %v1335
    %v1337 = vsel %vm1334, %v1336, %v1332
    %v1338 = vmul.f32 1.0, %v1337
    %v1339 = vxor.u32 %v1317, 2147483648
    %v1340 = vmul.f32 %v1339, 1.442695
    %v1341 = vpow.pop %v1340
    %v1342 = vadd.f32 %v1341, 1.0
    %v1343 = vrcp.pop %v1342
    %v1344 = vmul.f32 %v1342, %v1343
    %v1345 = vsub.f32 1.0, %v1344
    %v1346 = vmul.f32 %v1343, %v1345
    %v1347 = vadd.f32 %v1343, %v1346
    %vm1348 = vweird.f32 %v1342
    %vm1349 = vweird.f32 %v1343
    %vm1350 = vmor %vm1348, %vm1349
    %v1351 = vsel %vm1350, %v1343, %v1347
    %v1352 = vand.u32 2147483647, %v1342
    %vm1353 = vcmp.eq.f32.partialorder %v1352, 8.507059e+37
    %v1354 = vand.u32 %v1342, 2147483648
    %v1355 = vor.u32 1.1754944e-38, %v1354
    %v1356 = vsel %vm1353, %v1355, %v1351
    %v1357 = vmul.f32 1.0, %v1356
    %v1358 = vtanh.pop %v1318
    %v1359 = vxor.u32 %v1319, 2147483648
    %v1360 = vmul.f32 %v1359, 1.442695
    %v1361 = vpow.pop %v1360
    %v1362 = vadd.f32 %v1361, 1.0
    %v1363 = vrcp.pop %v1362
    %v1364 = vmul.f32 %v1362, %v1363
    %v1365 = vsub.f32 1.0, %v1364
    %v1366 = vmul.f32 %v1363, %v1365
    %v1367 = vadd.f32 %v1363, %v1366
    %vm1368 = vweird.f32 %v1362
    %vm1369 = vweird.f32 %v1363
    %vm1370 = vmor %vm1368, %vm1369
    %v1371 = vsel %vm1370, %v1363, %v1367
    %v1372 = vand.u32 2147483647, %v1362
    %vm1373 = vcmp.eq.f32.partialorder %v1372, 8.507059e+37
    %v1374 = vand.u32 %v1362, 2147483648
    %v1375 = vor.u32 1.1754944e-38, %v1374
    %v1376 = vsel %vm1373, %v1375, %v1371
    %v1377 = vmul.f32 1.0, %v1376
    %v1378 = vmul.f32 %v1357, %v1255
    %v1379 = vmul.f32 %v1338, %v1358
    %v1380 = vadd.f32 %v1378, %v1379
    %v1381 = vtanh.pop %v1380
    %v1382 = vmul.f32 %v1377, %v1381
    %1383 = vst [vmem:[#allocation3 + $0x28] sm:$0xff] %v1382
    %v1384 = vld [vmem:[#allocation2 + $0xc0] sm:$0xff]
    %v1385 = vld [vmem:[#allocation2 + $0xc8] sm:$0xff]
    %v1386 = vld [vmem:[#allocation2 + $0xd0] sm:$0xff]
    %v1387 = vld [vmem:[#allocation2 + $0xd8] sm:$0xff]
    %v1388 = vpack.c.bf16 %v1382, %v1382
    %1389 = vmatpush.bf16.msra.mxu0 %v603
    %1390 = vmatpush.bf16.msra.mxu0 %v599
    %1391 = vmatpush.bf16.msra.mxu0 %v595
    %1392 = vmatpush.bf16.msra.mxu0 %v591
    %1393 = vmatpush.bf16.msra.mxu0 %v587
    %1394 = vmatpush.bf16.msra.mxu0 %v583
    %1395 = vmatpush.bf16.msra.mxu0 %v579
    %1396 = vmatpush.bf16.msra.mxu0 %v575
    %1397 = vmatmul.bf16.gmra.mxu0 %v1388
    %v1398 = vpop.f32.mrf.mxu0
    %v1399 = vadd.f32 0.0, %v1398
    %v1400 = vpop.f32.mrf.mxu0
    %1401 = vdwg.mxu0
    %1402 = vmatpush.bf16.msra.mxu0 %v604
    %1403 = vmatpush.bf16.msra.mxu0 %v600
    %1404 = vmatpush.bf16.msra.mxu0 %v596
    %1405 = vmatpush.bf16.msra.mxu0 %v592
    %1406 = vmatpush.bf16.msra.mxu0 %v588
    %1407 = vmatpush.bf16.msra.mxu0 %v584
    %1408 = vmatpush.bf16.msra.mxu0 %v580
    %1409 = vmatpush.bf16.msra.mxu0 %v576
    %1410 = vmatmul.bf16.gmra.mxu0 %v1388
    %v1411 = vpop.f32.mrf.mxu0
    %v1412 = vadd.f32 0.0, %v1411
    %v1413 = vpop.f32.mrf.mxu0
    %1414 = vdwg.mxu0
    %1415 = vmatpush.bf16.msra.mxu0 %v605
    %1416 = vmatpush.bf16.msra.mxu0 %v601
    %1417 = vmatpush.bf16.msra.mxu0 %v597
    %1418 = vmatpush.bf16.msra.mxu0 %v593
    %1419 = vmatpush.bf16.msra.mxu0 %v589
    %1420 = vmatpush.bf16.msra.mxu0 %v585
    %1421 = vmatpush.bf16.msra.mxu0 %v581
    %1422 = vmatpush.bf16.msra.mxu0 %v577
    %1423 = vmatmul.bf16.gmra.mxu0 %v1388
    %v1424 = vpop.f32.mrf.mxu0
    %v1425 = vadd.f32 0.0, %v1424
    %v1426 = vpop.f32.mrf.mxu0
    %1427 = vdwg.mxu0
    %1428 = vmatpush.bf16.msra.mxu0 %v606
    %1429 = vmatpush.bf16.msra.mxu0 %v602
    %1430 = vmatpush.bf16.msra.mxu0 %v598
    %1431 = vmatpush.bf16.msra.mxu0 %v594
    %1432 = vmatpush.bf16.msra.mxu0 %v590
    %1433 = vmatpush.bf16.msra.mxu0 %v586
    %1434 = vmatpush.bf16.msra.mxu0 %v582
    %1435 = vmatpush.bf16.msra.mxu0 %v578
    %1436 = vmatmul.bf16.gmra.mxu0 %v1388
    %v1437 = vpop.f32.mrf.mxu0
    %v1438 = vadd.f32 0.0, %v1437
    %v1439 = vpop.f32.mrf.mxu0
    %1440 = vdwg.mxu0
    %v1441 = vadd.f32 %v1384, %v1399
    %v1442 = vadd.f32 %v1385, %v1412
    %v1443 = vadd.f32 %v1386, %v1425
    %v1444 = vadd.f32 %v1387, %v1438
    %v1445 = vxor.u32 %v1441, 2147483648
    %v1446 = vmul.f32 %v1445, 1.442695
    %v1447 = vpow.pop %v1446
    %v1448 = vadd.f32 %v1447, 1.0
    %v1449 = vrcp.pop %v1448
    %v1450 = vmul.f32 %v1448, %v1449
    %v1451 = vsub.f32 1.0, %v1450
    %v1452 = vmul.f32 %v1449, %v1451
    %v1453 = vadd.f32 %v1449, %v1452
    %vm1454 = vweird.f32 %v1448
    %vm1455 = vweird.f32 %v1449
    %vm1456 = vmor %vm1454, %vm1455
    %v1457 = vsel %vm1456, %v1449, %v1453
    %v1458 = vand.u32 2147483647, %v1448
    %vm1459 = vcmp.eq.f32.partialorder %v1458, 8.507059e+37
    %v1460 = vand.u32 %v1448, 2147483648
    %v1461 = vor.u32 1.1754944e-38, %v1460
    %v1462 = vsel %vm1459, %v1461, %v1457
    %v1463 = vmul.f32 1.0, %v1462
    %v1464 = vxor.u32 %v1442, 2147483648
    %v1465 = vmul.f32 %v1464, 1.442695
    %v1466 = vpow.pop %v1465
    %v1467 = vadd.f32 %v1466, 1.0
    %v1468 = vrcp.pop %v1467
    %v1469 = vmul.f32 %v1467, %v1468
    %v1470 = vsub.f32 1.0, %v1469
    %v1471 = vmul.f32 %v1468, %v1470
    %v1472 = vadd.f32 %v1468, %v1471
    %vm1473 = vweird.f32 %v1467
    %vm1474 = vweird.f32 %v1468
    %vm1475 = vmor %vm1473, %vm1474
    %v1476 = vsel %vm1475, %v1468, %v1472
    %v1477 = vand.u32 2147483647, %v1467
    %vm1478 = vcmp.eq.f32.partialorder %v1477, 8.507059e+37
    %v1479 = vand.u32 %v1467, 2147483648
    %v1480 = vor.u32 1.1754944e-38, %v1479
    %v1481 = vsel %vm1478, %v1480, %v1476
    %v1482 = vmul.f32 1.0, %v1481
    %v1483 = vtanh.pop %v1443
    %v1484 = vxor.u32 %v1444, 2147483648
    %v1485 = vmul.f32 %v1484, 1.442695
    %v1486 = vpow.pop %v1485
    %v1487 = vadd.f32 %v1486, 1.0
    %v1488 = vrcp.pop %v1487
    %v1489 = vmul.f32 %v1487, %v1488
    %v1490 = vsub.f32 1.0, %v1489
    %v1491 = vmul.f32 %v1488, %v1490
    %v1492 = vadd.f32 %v1488, %v1491
    %vm1493 = vweird.f32 %v1487
    %vm1494 = vweird.f32 %v1488
    %vm1495 = vmor %vm1493, %vm1494
    %v1496 = vsel %vm1495, %v1488, %v1492
    %v1497 = vand.u32 2147483647, %v1487
    %vm1498 = vcmp.eq.f32.partialorder %v1497, 8.507059e+37
    %v1499 = vand.u32 %v1487, 2147483648
    %v1500 = vor.u32 1.1754944e-38, %v1499
    %v1501 = vsel %vm1498, %v1500, %v1496
    %v1502 = vmul.f32 1.0, %v1501
    %v1503 = vmul.f32 %v1482, %v1380
    %v1504 = vmul.f32 %v1463, %v1483
    %v1505 = vadd.f32 %v1503, %v1504
    %v1506 = vtanh.pop %v1505
    %v1507 = vmul.f32 %v1502, %v1506
    %1508 = vst [vmem:[#allocation3 + $0x30] sm:$0xff] %v1507
    %v1509 = vld [vmem:[#allocation2 + $0xe0] sm:$0xff]
    %v1510 = vld [vmem:[#allocation2 + $0xe8] sm:$0xff]
    %v1511 = vld [vmem:[#allocation2 + $0xf0] sm:$0xff]
    %v1512 = vld [vmem:[#allocation2 + $0xf8] sm:$0xff]
    %v1513 = vpack.c.bf16 %v1507, %v1507
    %1514 = vmatpush.bf16.msra.mxu0 %v603
    %1515 = vmatpush.bf16.msra.mxu0 %v599
    %1516 = vmatpush.bf16.msra.mxu0 %v595
    %1517 = vmatpush.bf16.msra.mxu0 %v591
    %1518 = vmatpush.bf16.msra.mxu0 %v587
    %1519 = vmatpush.bf16.msra.mxu0 %v583
    %1520 = vmatpush.bf16.msra.mxu0 %v579
    %1521 = vmatpush.bf16.msra.mxu0 %v575
    %1522 = vmatmul.bf16.gmra.mxu0 %v1513
    %v1523 = vpop.f32.mrf.mxu0
    %v1524 = vadd.f32 0.0, %v1523
    %v1525 = vpop.f32.mrf.mxu0
    %1526 = vdwg.mxu0
    %1527 = vmatpush.bf16.msra.mxu0 %v604
    %1528 = vmatpush.bf16.msra.mxu0 %v600
    %1529 = vmatpush.bf16.msra.mxu0 %v596
    %1530 = vmatpush.bf16.msra.mxu0 %v592
    %1531 = vmatpush.bf16.msra.mxu0 %v588
    %1532 = vmatpush.bf16.msra.mxu0 %v584
    %1533 = vmatpush.bf16.msra.mxu0 %v580
    %1534 = vmatpush.bf16.msra.mxu0 %v576
    %1535 = vmatmul.bf16.gmra.mxu0 %v1513
    %v1536 = vpop.f32.mrf.mxu0
    %v1537 = vadd.f32 0.0, %v1536
    %v1538 = vpop.f32.mrf.mxu0
    %1539 = vdwg.mxu0
    %1540 = vmatpush.bf16.msra.mxu0 %v605
    %1541 = vmatpush.bf16.msra.mxu0 %v601
    %1542 = vmatpush.bf16.msra.mxu0 %v597
    %1543 = vmatpush.bf16.msra.mxu0 %v593
    %1544 = vmatpush.bf16.msra.mxu0 %v589
    %1545 = vmatpush.bf16.msra.mxu0 %v585
    %1546 = vmatpush.bf16.msra.mxu0 %v581
    %1547 = vmatpush.bf16.msra.mxu0 %v577
    %1548 = vmatmul.bf16.gmra.mxu0 %v1513
    %v1549 = vpop.f32.mrf.mxu0
    %v1550 = vadd.f32 0.0, %v1549
    %v1551 = vpop.f32.mrf.mxu0
    %1552 = vdwg.mxu0
    %1553 = vmatpush.bf16.msra.mxu0 %v606
    %1554 = vmatpush.bf16.msra.mxu0 %v602
    %1555 = vmatpush.bf16.msra.mxu0 %v598
    %1556 = vmatpush.bf16.msra.mxu0 %v594
    %1557 = vmatpush.bf16.msra.mxu0 %v590
    %1558 = vmatpush.bf16.msra.mxu0 %v586
    %1559 = vmatpush.bf16.msra.mxu0 %v582
    %1560 = vmatpush.bf16.msra.mxu0 %v578
    %1561 = vmatmul.bf16.gmra.mxu0 %v1513
    %v1562 = vpop.f32.mrf.mxu0
    %v1563 = vadd.f32 0.0, %v1562
    %v1564 = vpop.f32.mrf.mxu0
    %1565 = vdwg.mxu0
    %v1566 = vadd.f32 %v1509, %v1524
    %v1567 = vadd.f32 %v1510, %v1537
    %v1568 = vadd.f32 %v1511, %v1550
    %v1569 = vadd.f32 %v1512, %v1563
    %v1570 = vxor.u32 %v1566, 2147483648
    %v1571 = vmul.f32 %v1570, 1.442695
    %v1572 = vpow.pop %v1571
    %v1573 = vadd.f32 %v1572, 1.0
    %v1574 = vrcp.pop %v1573
    %v1575 = vmul.f32 %v1573, %v1574
    %v1576 = vsub.f32 1.0, %v1575
    %v1577 = vmul.f32 %v1574, %v1576
    %v1578 = vadd.f32 %v1574, %v1577
    %vm1579 = vweird.f32 %v1573
    %vm1580 = vweird.f32 %v1574
    %vm1581 = vmor %vm1579, %vm1580
    %v1582 = vsel %vm1581, %v1574, %v1578
    %v1583 = vand.u32 2147483647, %v1573
    %vm1584 = vcmp.eq.f32.partialorder %v1583, 8.507059e+37
    %v1585 = vand.u32 %v1573, 2147483648
    %v1586 = vor.u32 1.1754944e-38, %v1585
    %v1587 = vsel %vm1584, %v1586, %v1582
    %v1588 = vmul.f32 1.0, %v1587
    %v1589 = vxor.u32 %v1567, 2147483648
    %v1590 = vmul.f32 %v1589, 1.442695
    %v1591 = vpow.pop %v1590
    %v1592 = vadd.f32 %v1591, 1.0
    %v1593 = vrcp.pop %v1592
    %v1594 = vmul.f32 %v1592, %v1593
    %v1595 = vsub.f32 1.0, %v1594
    %v1596 = vmul.f32 %v1593, %v1595
    %v1597 = vadd.f32 %v1593, %v1596
    %vm1598 = vweird.f32 %v1592
    %vm1599 = vweird.f32 %v1593
    %vm1600 = vmor %vm1598, %vm1599
    %v1601 = vsel %vm1600, %v1593, %v1597
    %v1602 = vand.u32 2147483647, %v1592
    %vm1603 = vcmp.eq.f32.partialorder %v1602, 8.507059e+37
    %v1604 = vand.u32 %v1592, 2147483648
    %v1605 = vor.u32 1.1754944e-38, %v1604
    %v1606 = vsel %vm1603, %v1605, %v1601
    %v1607 = vmul.f32 1.0, %v1606
    %v1608 = vtanh.pop %v1568
    %v1609 = vxor.u32 %v1569, 2147483648
    %v1610 = vmul.f32 %v1609, 1.442695
    %v1611 = vpow.pop %v1610
    %v1612 = vadd.f32 %v1611, 1.0
    %v1613 = vrcp.pop %v1612
    %v1614 = vmul.f32 %v1612, %v1613
    %v1615 = vsub.f32 1.0, %v1614
    %v1616 = vmul.f32 %v1613, %v1615
    %v1617 = vadd.f32 %v1613, %v1616
    %vm1618 = vweird.f32 %v1612
    %vm1619 = vweird.f32 %v1613
    %vm1620 = vmor %vm1618, %vm1619
    %v1621 = vsel %vm1620, %v1613, %v1617
    %v1622 = vand.u32 2147483647, %v1612
    %vm1623 = vcmp.eq.f32.partialorder %v1622, 8.507059e+37
    %v1624 = vand.u32 %v1612, 2147483648
    %v1625 = vor.u32 1.1754944e-38, %v1624
    %v1626 = vsel %vm1623, %v1625, %v1621
    %v1627 = vmul.f32 1.0, %v1626
    %v1628 = vmul.f32 %v1607, %v1505
    %v1629 = vmul.f32 %v1588, %v1608
    %v1630 = vadd.f32 %v1628, %v1629
    %v1631 = vtanh.pop %v1630
    %v1632 = vmul.f32 %v1627, %v1631
    %1633 = vst [vmem:[#allocation3 + $0x38] sm:$0xff] %v1632
    %1634 = vst [vmem:[#allocation4] sm:$0xff] %v1632
    %1635 = vst [vmem:[#allocation5] sm:$0xff] %v1630
    %1636 = vst [vmem:[#allocation10] sm:$0xff] %v1632
    %1637 = vst [vmem:[#allocation12] sm:$0xff] %v1630
    %v1638 = vld [vmem:[#allocation3] sm:$0xff]
    %v1639 = vld [vmem:[#allocation3 + $0x8] sm:$0xff]
    %v1640 = vld [vmem:[#allocation3 + $0x10] sm:$0xff]
    %v1641 = vld [vmem:[#allocation3 + $0x18] sm:$0xff]
    %v1642 = vld [vmem:[#allocation3 + $0x20] sm:$0xff]
    %v1643 = vld [vmem:[#allocation3 + $0x28] sm:$0xff]
    %v1644 = vld [vmem:[#allocation3 + $0x30] sm:$0xff]
    %v1645 = vld [vmem:[#allocation3 + $0x38] sm:$0xff]
    %v1646 = vpack.c.bf16 %v1639, %v1638
    %v1647 = vpack.c.bf16 %v1641, %v1640
    %v1648 = vpack.c.bf16 %v1643, %v1642
    %v1649 = vpack.c.bf16 %v1645, %v1644
    %v1650 = vld [vmem:[%s6] sm:$0xff]
    %v1651 = vld [vmem:[%s6 + $0x8] sm:$0xff]
    %v1652 = vld [vmem:[%s6 + $0x10] sm:$0xff]
    %v1653 = vld [vmem:[%s6 + $0x18] sm:$0xff]
    %v1654 = vld [vmem:[%s6 + $0x20] sm:$0xff]
    %v1655 = vld [vmem:[%s6 + $0x28] sm:$0xff]
    %v1656 = vld [vmem:[%s6 + $0x30] sm:$0xff]
    %v1657 = vld [vmem:[%s6 + $0x38] sm:$0xff]
    %v1658 = vld [vmem:[%s6 + $0x40] sm:$0xff]
    %v1659 = vld [vmem:[%s6 + $0x48] sm:$0xff]
    %v1660 = vld [vmem:[%s6 + $0x50] sm:$0xff]
    %v1661 = vld [vmem:[%s6 + $0x58] sm:$0xff]
    %v1662 = vld [vmem:[%s6 + $0x60] sm:$0xff]
    %v1663 = vld [vmem:[%s6 + $0x68] sm:$0xff]
    %v1664 = vld [vmem:[%s6 + $0x70] sm:$0xff]
    %v1665 = vld [vmem:[%s6 + $0x78] sm:$0xff]
    %v1666 = vld [vmem:[%s7] sm:$0x3]
    %v1668 = vperm.slane %v1666, 0
    %v1669 = vperm.slane %v1666, 1
    %v1688 = vunpack.c.l.b16 %v1650
    %v1689 = vunpack.c.h.b16 %v1650
    %v1690 = vunpack.c.l.b16 %v1651
    %v1691 = vunpack.c.h.b16 %v1651
    %v1692 = vunpack.c.l.b16 %v1652
    %v1693 = vunpack.c.h.b16 %v1652
    %v1694 = vunpack.c.l.b16 %v1653
    %v1695 = vunpack.c.h.b16 %v1653
    %v1696 = vunpack.c.l.b16 %v1654
    %v1697 = vunpack.c.h.b16 %v1654
    %v1698 = vunpack.c.l.b16 %v1655
    %v1699 = vunpack.c.h.b16 %v1655
    %v1700 = vunpack.c.l.b16 %v1656
    %v1701 = vunpack.c.h.b16 %v1656
    %v1702 = vunpack.c.l.b16 %v1657
    %v1703 = vunpack.c.h.b16 %v1657
    %v1704 = vunpack.c.l.b16 %v1658
    %v1705 = vunpack.c.h.b16 %v1658
    %v1706 = vunpack.c.l.b16 %v1659
    %v1707 = vunpack.c.h.b16 %v1659
    %v1708 = vunpack.c.l.b16 %v1660
    %v1709 = vunpack.c.h.b16 %v1660
    %v1710 = vunpack.c.l.b16 %v1661
    %v1711 = vunpack.c.h.b16 %v1661
    %v1712 = vunpack.c.l.b16 %v1662
    %v1713 = vunpack.c.h.b16 %v1662
    %v1714 = vunpack.c.l.b16 %v1663
    %v1715 = vunpack.c.h.b16 %v1663
    %v1716 = vunpack.c.l.b16 %v1664
    %v1717 = vunpack.c.h.b16 %v1664
    %v1718 = vunpack.c.l.b16 %v1665
    %v1719 = vunpack.c.h.b16 %v1665
    %v1720 = vpack.c.b16 %v1690, %v1688
    %v1721 = vpack.c.b16 %v1691, %v1689
    %v1722 = vpack.c.b16 %v1694, %v1692
    %v1723 = vpack.c.b16 %v1695, %v1693
    %v1724 = vpack.c.b16 %v1698, %v1696
    %v1725 = vpack.c.b16 %v1699, %v1697
    %v1726 = vpack.c.b16 %v1702, %v1700
    %v1727 = vpack.c.b16 %v1703, %v1701
    %v1728 = vpack.c.b16 %v1706, %v1704
    %v1729 = vpack.c.b16 %v1707, %v1705
    %v1730 = vpack.c.b16 %v1710, %v1708
    %v1731 = vpack.c.b16 %v1711, %v1709
    %v1732 = vpack.c.b16 %v1714, %v1712
    %v1733 = vpack.c.b16 %v1715, %v1713
    %v1734 = vpack.c.b16 %v1718, %v1716
    %v1735 = vpack.c.b16 %v1719, %v1717
    %1752 = vmatpush.bf16.msra.mxu0 %v1734
    %1753 = vmatpush.bf16.msra.mxu0 %v1732
    %1754 = vmatpush.bf16.msra.mxu0 %v1730
    %1755 = vmatpush.bf16.msra.mxu0 %v1728
    %1756 = vmatpush.bf16.msra.mxu0 %v1726
    %1757 = vmatpush.bf16.msra.mxu0 %v1724
    %1758 = vmatpush.bf16.msra.mxu0 %v1722
    %1759 = vmatpush.bf16.msra.mxu0 %v1720
    %1760 = vmatmul.bf16.gmra.mxu0 %v1646
    %v1761 = vpop.f32.mrf.mxu0
    %v1762 = vadd.f32 %v1668, %v1761
    %v1763 = vpop.f32.mrf.mxu0
    %v1764 = vadd.f32 %v1668, %v1763
    %1765 = vmatmul.bf16.gmra.mxu0 %v1647
    %v1766 = vpop.f32.mrf.mxu0
    %v1767 = vadd.f32 %v1668, %v1766
    %v1768 = vpop.f32.mrf.mxu0
    %v1769 = vadd.f32 %v1668, %v1768
    %1770 = vmatmul.bf16.gmra.mxu0 %v1648
    %v1771 = vpop.f32.mrf.mxu0
    %v1772 = vadd.f32 %v1668, %v1771
    %v1773 = vpop.f32.mrf.mxu0
    %v1774 = vadd.f32 %v1668, %v1773
    %1775 = vmatmul.bf16.gmra.mxu0 %v1649
    %v1776 = vpop.f32.mrf.mxu0
    %v1777 = vadd.f32 %v1668, %v1776
    %v1778 = vpop.f32.mrf.mxu0
    %v1779 = vadd.f32 %v1668, %v1778
    %1780 = vdwg.mxu0
    %1781 = vmatpush.bf16.msra.mxu0 %v1735
    %1782 = vmatpush.bf16.msra.mxu0 %v1733
    %1783 = vmatpush.bf16.msra.mxu0 %v1731
    %1784 = vmatpush.bf16.msra.mxu0 %v1729
    %1785 = vmatpush.bf16.msra.mxu0 %v1727
    %1786 = vmatpush.bf16.msra.mxu0 %v1725
    %1787 = vmatpush.bf16.msra.mxu0 %v1723
    %1788 = vmatpush.bf16.msra.mxu0 %v1721
    %1789 = vmatmul.bf16.gmra.mxu0 %v1646
    %v1790 = vpop.f32.mrf.mxu0
    %v1791 = vadd.f32 %v1669, %v1790
    %v1792 = vpop.f32.mrf.mxu0
    %v1793 = vadd.f32 %v1669, %v1792
    %1794 = vmatmul.bf16.gmra.mxu0 %v1647
    %v1795 = vpop.f32.mrf.mxu0
    %v1796 = vadd.f32 %v1669, %v1795
    %v1797 = vpop.f32.mrf.mxu0
    %v1798 = vadd.f32 %v1669, %v1797
    %1799 = vmatmul.bf16.gmra.mxu0 %v1648
    %v1800 = vpop.f32.mrf.mxu0
    %v1801 = vadd.f32 %v1669, %v1800
    %v1802 = vpop.f32.mrf.mxu0
    %v1803 = vadd.f32 %v1669, %v1802
    %1804 = vmatmul.bf16.gmra.mxu0 %v1649
    %v1805 = vpop.f32.mrf.mxu0
    %v1806 = vadd.f32 %v1669, %v1805
    %v1807 = vpop.f32.mrf.mxu0
    %v1808 = vadd.f32 %v1669, %v1807
    %1809 = vdwg.mxu0
    %1810 = vst [vmem:[#allocation9] sm:$0xff] %v1762
    %1811 = vst [vmem:[#allocation9 + $0x8] sm:$0xff] %v1791
    %1812 = vst [vmem:[#allocation9 + $0x10] sm:$0xff] %v1764
    %1813 = vst [vmem:[#allocation9 + $0x18] sm:$0xff] %v1793
    %1814 = vst [vmem:[#allocation9 + $0x20] sm:$0xff] %v1767
    %1815 = vst [vmem:[#allocation9 + $0x28] sm:$0xff] %v1796
    %1816 = vst [vmem:[#allocation9 + $0x30] sm:$0xff] %v1769
    %1817 = vst [vmem:[#allocation9 + $0x38] sm:$0xff] %v1798
    %1818 = vst [vmem:[#allocation9 + $0x40] sm:$0xff] %v1772
    %1819 = vst [vmem:[#allocation9 + $0x48] sm:$0xff] %v1801
    %1820 = vst [vmem:[#allocation9 + $0x50] sm:$0xff] %v1774
    %1821 = vst [vmem:[#allocation9 + $0x58] sm:$0xff] %v1803
    %1822 = vst [vmem:[#allocation9 + $0x60] sm:$0xff] %v1777
    %1823 = vst [vmem:[#allocation9 + $0x68] sm:$0xff] %v1806
    %1824 = vst [vmem:[#allocation9 + $0x70] sm:$0xff] %v1779
    %1825 = vst [vmem:[#allocation9 + $0x78] sm:$0xff] %v1808
    // Predicated region
    $region42: #{my_lstm_forward.1} parent=1 // pred_check
      _
    $region43: #{my_lstm_forward.1} parent=1 // pred_check_branch
      %1827 = sbr.rel (0) target = $region45
    $region44: #{my_lstm_forward.1} parent=1 // pred_region
      %1829 = vsyncadd [#allocation8], 0
      %s1830 = sshll.u32 [#allocation9], 4
      %s1831 = int_to_ptr.vmem [resolvable:$true] %s1830
      %s1832 = sshll.u32 %s8, 4
      %s1833 = int_to_ptr.hbm [resolvable:$true] %s1832
      %1838 = dma.vmem_to_hbm [thread:$0]  %s1831, 2048, %s1833, [#allocation8], 256, 256, 16
    $region45: #{my_lstm_forward.1} parent=1 // pred_fallthru
      _
    // Predicated region
    $region46: #{my_lstm_forward.1} parent=1 // pred_check
      _
    $region47: #{my_lstm_forward.1} parent=1 // pred_check_branch
      %1840 = sbr.rel (0) target = $region49
    $region48: #{my_lstm_forward.1} parent=1 // pred_region
      %1842 = vsyncadd [#allocation11], 0
      %s1844 = sshll.u32 [#allocation10], 4
      %s1845 = int_to_ptr.vmem [resolvable:$true] %s1844
      %s1846 = sshll.u32 %s9, 4
      %s1847 = int_to_ptr.hbm [resolvable:$true] %s1846
      %1849 = dma.vmem_to_hbm [thread:$0]  %s1845, 128, %s1847, [#allocation11]
    $region49: #{my_lstm_forward.1} parent=1 // pred_fallthru
      _
    // Predicated region
    $region50: #{my_lstm_forward.1} parent=1 // pred_check
      _
    $region51: #{my_lstm_forward.1} parent=1 // pred_check_branch
      %1851 = sbr.rel (0) target = $region53
    $region52: #{my_lstm_forward.1} parent=1 // pred_region
      %1853 = vsyncadd [#allocation11], 0
      %s1855 = sshll.u32 [#allocation12], 4
      %s1856 = int_to_ptr.vmem [resolvable:$true] %s1855
      %s1857 = sshll.u32 %s10, 4
      %s1858 = int_to_ptr.hbm [resolvable:$true] %s1857
      %1860 = dma.vmem_to_hbm [thread:$0]  %s1856, 128, %s1858, [#allocation11]
    $region53: #{my_lstm_forward.1} parent=1 // pred_fallthru
      _
    // Predicated region
    $region54: #{my_lstm_forward.1} parent=1 // pred_check
      _
    $region55: #{my_lstm_forward.1} parent=1 // pred_check_branch
      %1862 = sbr.rel (0) target = $region57
    $region56: #{my_lstm_forward.1} parent=1 // pred_region
      %1864 = dma.done [#allocation8], 2048
    $region57: #{my_lstm_forward.1} parent=1 // pred_fallthru
      _
    // Predicated region
    $region58: #{my_lstm_forward.1} parent=1 // pred_check
      _
    $region59: #{my_lstm_forward.1} parent=1 // pred_check_branch
      %1866 = sbr.rel (0) target = $region61
    $region60: #{my_lstm_forward.1} parent=1 // pred_region
      %1868 = dma.done [#allocation11], 128
    $region61: #{my_lstm_forward.1} parent=1 // pred_fallthru
      _
    // Predicated region
    $region62: #{my_lstm_forward.1} parent=1 // pred_check
      _
    $region63: #{my_lstm_forward.1} parent=1 // pred_check_branch
      %1870 = sbr.rel (0) target = $region65
    $region64: #{my_lstm_forward.1} parent=1 // pred_region
      %1872 = dma.done [#allocation11], 128
    $region65: #{my_lstm_forward.1} parent=1 // pred_fallthru
      _
    %1873 = vsyncpa [#allocation7], 1
    %1874 = vsyncpa [#allocation8], 1
    %1875 = vsyncpa [#allocation11], 1

</llo_original>
